<compile_context>
chip_gen: v7x
topology: tpu7x:2x2x1
jax: 0.10.0
libtpu: 0.0.40
codegen_flags: <defaults>
</compile_context>

<pallas_src>
import functools

import jax
import jax.numpy as jnp
import numpy as np
from jax.experimental import pallas as pl
from jax.experimental.pallas import tpu as pltpu

EPS = 1e-5            # nn.InstanceNorm2d default eps, affine=False
WITH_PAC = True       # matches the module-level `with_pac` flag in the repo

_OFFS = [(dy, dx) for dy in range(3) for dx in range(3)]   # tap order ky*3+kx


# ----------------------------- Pallas kernel --------------------------------

def _instance_norm_relu(x, hw):
    # InstanceNorm2d (no affine, biased variance) + ReLU over the lane axis.
    # var = E[x^2] - mean^2: both lane reductions issue straight from x.
    inv = 1.0 / float(hw)
    mean = jnp.sum(x, axis=1, keepdims=True) * inv
    ex2 = jnp.sum(x * x, axis=1, keepdims=True) * inv
    var = jnp.maximum(ex2 - mean * mean, 0.0)
    return jnp.maximum((x - mean) * jax.lax.rsqrt(var + EPS), 0.0)


def _decoder_kernel(masks_ref, feat_ref, guide_ref, pac_w_ref, dec_w_ref,
                    out_ref, col_ref, *, W, HW, HWP, with_pac):
    """Fused PacConv2d+IN+ReLU followed by Conv2d(3x3)+IN+ReLU.

    masks : (16, HWP)       rows 0..8 = per-tap validity (row 4 = lane-valid)
    feat  : (1, CinP, HWP)  features, channel/lane zero-padded
    guide : (1, CgP,  HWP)  guide, channel/lane zero-padded
    pac_w : (CinP, 9*CinP)  column index = (ky*3+kx)*CinP + cin
    dec_w : (CoutP, 9*CinP) same column layout
    out   : (1, CoutP, HWP)
    col   : VMEM scratch (9*CinP, HWP), reused by both convolutions
    """
    feat = feat_ref[0]       # (CinP, HWP)
    guide = guide_ref[0]     # (CgP,  HWP)
    cinp = feat.shape[0]

    def roll(arr, dy, dx):
        # out[p] = arr[p + s] along the flattened HW (lane) axis.
        s = (dy - 1) * W + (dx - 1)
        return pltpu.roll(arr, shift=(-s) % HWP, axis=1)

    def mask(t):
        return masks_ref[pl.ds(t, 1), :]          # (1, HWP)

    x = feat
    if with_pac:
        # ---- stage 1: PacConv2d (3x3, gaussian kernel) + IN + ReLU ----
        nh_g2 = -0.5 * jnp.sum(guide * guide, axis=0, keepdims=True)  # (1,HWP)
        for t, (dy, dx) in enumerate(_OFFS):
            rows = pl.ds(t * cinp, cinp)
            if (dy, dx) == (1, 1):
                col_ref[rows, :] = feat                     # center tap: k == 1
            else:
                # Guide tap left unmasked: k only matters where the (masked)
                # feature tap is nonzero, and the argument is always >= 0.
                g_r = roll(guide, dy, dx)
                dot_gg = jnp.sum(g_r * guide, axis=0, keepdims=True)
                k = jnp.exp(roll(nh_g2, dy, dx) + nh_g2 + dot_gg)
                col_ref[rows, :] = roll(feat, dy, dx) * (mask(t) * k)
        pac = jnp.dot(pac_w_ref[...], col_ref[...],
                      preferred_element_type=jnp.float32)   # (CinP, HWP)
        x = _instance_norm_relu(pac, HW)

    # ---- stage 2: Conv2d(3x3, pad=1) + IN + ReLU (the `decoding` block) ----
    for t, (dy, dx) in enumerate(_OFFS):
        rows = pl.ds(t * cinp, cinp)
        if (dy, dx) == (1, 1):
            if with_pac and HWP != HW:
                # zero pad lanes of the IN output so they can't pollute the
                # stage-2 statistics (mask row 4 == lane-valid).
                col_ref[rows, :] = x * mask(t)
            else:
                col_ref[rows, :] = x
        else:
            col_ref[rows, :] = roll(x, dy, dx) * mask(t)
    out = jnp.dot(dec_w_ref[...], col_ref[...],
                  preferred_element_type=jnp.float32)       # (CoutP, HWP)
    out_ref[0] = _instance_norm_relu(out, HW)


# ------------------------------ JAX wrapper ----------------------------------

def _round_up(x, m):
    return (x + m - 1) // m * m


def _tap_masks(H, W, HWP):
    """(16, HWP) f32: rows 0..8 are the 3x3 tap validity masks (row-major),
    including lane validity (idx < H*W); rows 9..15 are zero padding."""
    HW = H * W
    idx = np.arange(HWP)
    yy, xx = idx // W, idx % W
    rows = np.zeros((16, HWP), np.float32)
    for t, (dy, dx) in enumerate(_OFFS):
        ys, xs = yy + (dy - 1), xx + (dx - 1)
        rows[t] = (ys >= 0) & (ys < H) & (xs >= 0) & (xs < W) & (idx < HW)
    return jnp.asarray(rows)


def decoder_forward(feat, guide, params):
    B, Cin, H, W = feat.shape
    Cg = guide.shape[1]
    Cout = params["dec_w"].shape[0]
    HW = H * W
    HWP = _round_up(HW, 128)          # lane-dense blocks / unmasked stores
    CinP = _round_up(Cin, 8)
    CgP = _round_up(Cg, 8)
    CoutP = _round_up(Cout, 8)

    # Flatten spatial dims onto lanes; zero-pad channels (sublanes) and lanes.
    feat2 = jnp.pad(feat.astype(jnp.float32).reshape(B, Cin, HW),
                    ((0, 0), (0, CinP - Cin), (0, HWP - HW)))
    guide2 = jnp.pad(guide.astype(jnp.float32).reshape(B, Cg, HW),
                     ((0, 0), (0, CgP - Cg), (0, HWP - HW)))

    # Weights -> (Cout, 9*Cin) layout padded to the padded channels.  Biases
    # are dropped: exactly cancelled by the affine-free InstanceNorm.
    pac_w = jnp.transpose(params["pac_w"], (0, 2, 3, 1))           # (Cin,3,3,Cin)
    pac_w = jnp.pad(pac_w, ((0, CinP - Cin), (0, 0), (0, 0), (0, CinP - Cin)))
    pac_w2d = pac_w.reshape(CinP, 9 * CinP).astype(jnp.float32)

    dec_w = jnp.transpose(params["dec_w"], (0, 2, 3, 1))           # (Cout,3,3,Cin)
    dec_w = jnp.pad(dec_w, ((0, CoutP - Cout), (0, 0), (0, 0), (0, CinP - Cin)))
    dec_w2d = dec_w.reshape(CoutP, 9 * CinP).astype(jnp.float32)

    masks = _tap_masks(H, W, HWP)

    # Explicit VMEM budget: double-buffered I/O blocks + weights + the shared
    # col scratch + headroom for live intermediates (x, rolls, k, IN temps).
    fb = 4
    budget = (2 * (CinP + CgP + CoutP + 16) * HWP * fb
              + 2 * (CinP + CoutP) * 9 * CinP * fb
              + 9 * CinP * HWP * fb
              + 6 * max(CinP, CgP, CoutP) * HWP * fb)
    vmem_limit = int(min(64 * 1024 * 1024, max(2 * budget, 16 * 1024 * 1024)))

    out = pl.pallas_call(
        functools.partial(_decoder_kernel, W=W, HW=HW, HWP=HWP,
                          with_pac=WITH_PAC),
        out_shape=jax.ShapeDtypeStruct((B, CoutP, HWP), jnp.float32),
        grid=(B,),
        in_specs=[
            pl.BlockSpec((16, HWP), lambda b: (0, 0)),
            pl.BlockSpec((1, CinP, HWP), lambda b: (b, 0, 0)),
            pl.BlockSpec((1, CgP, HWP), lambda b: (b, 0, 0)),
            pl.BlockSpec((CinP, 9 * CinP), lambda b: (0, 0)),
            pl.BlockSpec((CoutP, 9 * CinP), lambda b: (0, 0)),
        ],
        out_specs=pl.BlockSpec((1, CoutP, HWP), lambda b: (b, 0, 0)),
        scratch_shapes=[pltpu.VMEM((9 * CinP, HWP), jnp.float32)],
        compiler_params=pltpu.CompilerParams(
            dimension_semantics=("parallel",),
            vmem_limit_bytes=vmem_limit),
    )(masks, feat2, guide2, pac_w2d, dec_w2d)

    return out[:, :Cout, :HW].reshape(B, Cout, H, W)


# --------------------------- pure-JAX reference ------------------------------

def decoder_ref(feat, guide, params):
    B, Cin, H, W = feat.shape

    def inorm_relu(x):
        m = jnp.mean(x, axis=(2, 3), keepdims=True)
        v = jnp.mean((x - m) ** 2, axis=(2, 3), keepdims=True)
        return jnp.maximum((x - m) / jnp.sqrt(v + EPS), 0.0)

    x = feat
    if WITH_PAC:
        fp = jnp.pad(feat, ((0, 0), (0, 0), (1, 1), (1, 1)))
        gp = jnp.pad(guide, ((0, 0), (0, 0), (1, 1), (1, 1)))
        acc = jnp.zeros((B, Cin, H, W), jnp.float32)
        for dy in range(3):
            for dx in range(3):
                g_o = gp[:, :, dy:dy + H, dx:dx + W]
                k = jnp.exp(-0.5 * jnp.sum((g_o - guide) ** 2, axis=1, keepdims=True))
                f_o = fp[:, :, dy:dy + H, dx:dx + W] * k
                acc = acc + jnp.einsum("oc,bchw->bohw",
                                       params["pac_w"][:, :, dy, dx], f_o)
        acc = acc + params["pac_b"][None, :, None, None]
        x = inorm_relu(acc)

    Cout = params["dec_w"].shape[0]
    xp = jnp.pad(x, ((0, 0), (0, 0), (1, 1), (1, 1)))
    acc2 = jnp.zeros((B, Cout, H, W), jnp.float32)
    for dy in range(3):
        for dx in range(3):
            acc2 = acc2 + jnp.einsum("oc,bchw->bohw",
                                     params["dec_w"][:, :, dy, dx],
                                     xp[:, :, dy:dy + H, dx:dx + W])
    acc2 = acc2 + params["dec_b"][None, :, None, None]
    return inorm_relu(acc2)


# ---------------------------------- main --------------------------------------

if __name__ == "__main__":
    key = jax.random.PRNGKey(0)
    fwd = jax.jit(decoder_forward)

    test_shapes = [
        (2, 4, 4, 8, 16, 16),   # H*W = 256 (already 128-aligned)
        (2, 4, 4, 8, 10, 12),   # H*W = 120 -> exercises the padded-lane path
    ]
    for (B, Cin, Cg, Cout, H, W) in test_shapes:
        k1, k2, k3, k4, k5, k6, key = jax.random.split(key, 7)
        feat = jax.random.normal(k1, (B, Cin, H, W), jnp.float32)
        guide = jax.random.normal(k2, (B, Cg, H, W), jnp.float32) * 0.5
        params = {
            "pac_w": jax.random.normal(k3, (Cin, Cin, 3, 3), jnp.float32) * 0.2,
            "pac_b": jax.random.normal(k4, (Cin,), jnp.float32) * 0.1,
            "dec_w": jax.random.normal(k5, (Cout, Cin, 3, 3), jnp.float32) * 0.2,
            "dec_b": jax.random.normal(k6, (Cout,), jnp.float32) * 0.1,
        }
        out = jax.block_until_ready(fwd(feat, guide, params))
        ref = decoder_ref(feat, guide, params)
        np.testing.assert_allclose(np.asarray(out), np.asarray(ref),
                                   rtol=2e-4, atol=2e-4)

    print("KERNEL_OK")
</pallas_src>

<mosaic_0001>
module attributes {stable_mosaic.version = 11 : i64} {
  func.func @_decoder_kernel(%arg0: i32, %arg1: memref<16x256xf32, #tpu.memory_space<vmem>>, %arg2: memref<1x8x256xf32, #tpu.memory_space<vmem>>, %arg3: memref<1x8x256xf32, #tpu.memory_space<vmem>>, %arg4: memref<8x72xf32, #tpu.memory_space<vmem>>, %arg5: memref<8x72xf32, #tpu.memory_space<vmem>>, %arg6: memref<1x8x256xf32, #tpu.memory_space<vmem>>, %arg7: memref<72x256xf32, #tpu.memory_space<vmem>>) attributes {dimension_semantics = [#tpu.dimension_semantics<parallel>], iteration_bounds = array<i64: 2>, scalar_prefetch = 0 : i64, scratch_operands = 1 : i64, tpu.core_type = #tpu.core_type<tc>, window_params = [{pipeline_mode = #tpu.pipeline_mode<synchronous>, transform_indices = @transform_0, window_bounds = array<i64: 16, 256>}, {transform_indices = @transform_1, window_bounds = array<i64: 1, 8, 256>}, {transform_indices = @transform_2, window_bounds = array<i64: 1, 8, 256>}, {pipeline_mode = #tpu.pipeline_mode<synchronous>, transform_indices = @transform_3, window_bounds = array<i64: 8, 72>}, {pipeline_mode = #tpu.pipeline_mode<synchronous>, transform_indices = @transform_4, window_bounds = array<i64: 8, 72>}, {transform_indices = @transform_5, window_bounds = array<i64: 1, 8, 256>}]} {
    %c0 = arith.constant 0 : index
    %c0_0 = arith.constant 0 : index
    %c0_1 = arith.constant 0 : index
    %0 = vector.load %arg2[%c0, %c0_0, %c0_1] : memref<1x8x256xf32, #tpu.memory_space<vmem>>, vector<1x8x256xf32>
    %1 = vector.shape_cast %0 : vector<1x8x256xf32> to vector<8x256xf32>
    %c0_2 = arith.constant 0 : index
    %c0_3 = arith.constant 0 : index
    %c0_4 = arith.constant 0 : index
    %2 = vector.load %arg3[%c0_2, %c0_3, %c0_4] : memref<1x8x256xf32, #tpu.memory_space<vmem>>, vector<1x8x256xf32>
    %3 = vector.shape_cast %2 : vector<1x8x256xf32> to vector<8x256xf32>
    %4 = arith.mulf %3, %3 : vector<8x256xf32>
    %cst = arith.constant dense<0.000000e+00> : vector<256xf32>
    %5 = vector.multi_reduction <add>, %4, %cst [0] : vector<8x256xf32> to vector<256xf32>
    %6 = vector.shape_cast %5 : vector<256xf32> to vector<1x256xf32>
    %cst_5 = arith.constant -5.000000e-01 : f32
    %7 = vector.broadcast %cst_5 : f32 to vector<1x256xf32>
    %8 = arith.mulf %7, %6 : vector<1x256xf32>
    %c17_i32 = arith.constant 17 : i32
    %9 = tpu.dynamic_rotate %3 by %c17_i32 dim 1 : vector<8x256xf32>, i32 -> vector<8x256xf32>
    %10 = arith.mulf %9, %3 : vector<8x256xf32>
    %cst_6 = arith.constant dense<0.000000e+00> : vector<256xf32>
    %11 = vector.multi_reduction <add>, %10, %cst_6 [0] : vector<8x256xf32> to vector<256xf32>
    %12 = vector.shape_cast %11 : vector<256xf32> to vector<1x256xf32>
    %c17_i32_7 = arith.constant 17 : i32
    %13 = tpu.dynamic_rotate %8 by %c17_i32_7 dim 1 : vector<1x256xf32>, i32 -> vector<1x256xf32>
    %14 = arith.addf %13, %8 : vector<1x256xf32>
    %15 = arith.addf %14, %12 : vector<1x256xf32>
    %16 = math.exp %15 : vector<1x256xf32>
    %c17_i32_8 = arith.constant 17 : i32
    %17 = tpu.dynamic_rotate %1 by %c17_i32_8 dim 1 : vector<8x256xf32>, i32 -> vector<8x256xf32>
    %c0_9 = arith.constant 0 : index
    %c0_10 = arith.constant 0 : index
    %18 = vector.load %arg1[%c0_9, %c0_10] : memref<16x256xf32, #tpu.memory_space<vmem>>, vector<1x256xf32>
    %19 = arith.mulf %18, %16 : vector<1x256xf32>
    %20 = vector.broadcast %19 : vector<1x256xf32> to vector<8x256xf32>
    %21 = arith.mulf %17, %20 : vector<8x256xf32>
    %c0_11 = arith.constant 0 : index
    %c0_12 = arith.constant 0 : index
    %22 = vector.load %arg7[%c0_11, %c0_12] : memref<72x256xf32, #tpu.memory_space<vmem>>, vector<8x256xf32>
    tpu.vector_store %arg7[%c0_11, %c0_12], %21 {strides = array<i32>} : memref<72x256xf32, #tpu.memory_space<vmem>>, vector<8x256xf32>,
    %c16_i32 = arith.constant 16 : i32
    %23 = tpu.dynamic_rotate %3 by %c16_i32 dim 1 : vector<8x256xf32>, i32 -> vector<8x256xf32>
    %24 = arith.mulf %23, %3 : vector<8x256xf32>
    %cst_13 = arith.constant dense<0.000000e+00> : vector<256xf32>
    %25 = vector.multi_reduction <add>, %24, %cst_13 [0] : vector<8x256xf32> to vector<256xf32>
    %26 = vector.shape_cast %25 : vector<256xf32> to vector<1x256xf32>
    %c16_i32_14 = arith.constant 16 : i32
    %27 = tpu.dynamic_rotate %8 by %c16_i32_14 dim 1 : vector<1x256xf32>, i32 -> vector<1x256xf32>
    %28 = arith.addf %27, %8 : vector<1x256xf32>
    %29 = arith.addf %28, %26 : vector<1x256xf32>
    %30 = math.exp %29 : vector<1x256xf32>
    %c16_i32_15 = arith.constant 16 : i32
    %31 = tpu.dynamic_rotate %1 by %c16_i32_15 dim 1 : vector<8x256xf32>, i32 -> vector<8x256xf32>
    %c1 = arith.constant 1 : index
    %c0_16 = arith.constant 0 : index
    %32 = vector.load %arg1[%c1, %c0_16] : memref<16x256xf32, #tpu.memory_space<vmem>>, vector<1x256xf32>
    %33 = arith.mulf %32, %30 : vector<1x256xf32>
    %34 = vector.broadcast %33 : vector<1x256xf32> to vector<8x256xf32>
    %35 = arith.mulf %31, %34 : vector<8x256xf32>
    %c8 = arith.constant 8 : index
    %c0_17 = arith.constant 0 : index
    %36 = vector.load %arg7[%c8, %c0_17] : memref<72x256xf32, #tpu.memory_space<vmem>>, vector<8x256xf32>
    tpu.vector_store %arg7[%c8, %c0_17], %35 {strides = array<i32>} : memref<72x256xf32, #tpu.memory_space<vmem>>, vector<8x256xf32>,
    %c15_i32 = arith.constant 15 : i32
    %37 = tpu.dynamic_rotate %3 by %c15_i32 dim 1 : vector<8x256xf32>, i32 -> vector<8x256xf32>
    %38 = arith.mulf %37, %3 : vector<8x256xf32>
    %cst_18 = arith.constant dense<0.000000e+00> : vector<256xf32>
    %39 = vector.multi_reduction <add>, %38, %cst_18 [0] : vector<8x256xf32> to vector<256xf32>
    %40 = vector.shape_cast %39 : vector<256xf32> to vector<1x256xf32>
    %c15_i32_19 = arith.constant 15 : i32
    %41 = tpu.dynamic_rotate %8 by %c15_i32_19 dim 1 : vector<1x256xf32>, i32 -> vector<1x256xf32>
    %42 = arith.addf %41, %8 : vector<1x256xf32>
    %43 = arith.addf %42, %40 : vector<1x256xf32>
    %44 = math.exp %43 : vector<1x256xf32>
    %c15_i32_20 = arith.constant 15 : i32
    %45 = tpu.dynamic_rotate %1 by %c15_i32_20 dim 1 : vector<8x256xf32>, i32 -> vector<8x256xf32>
    %c2 = arith.constant 2 : index
    %c0_21 = arith.constant 0 : index
    %46 = vector.load %arg1[%c2, %c0_21] : memref<16x256xf32, #tpu.memory_space<vmem>>, vector<1x256xf32>
    %47 = arith.mulf %46, %44 : vector<1x256xf32>
    %48 = vector.broadcast %47 : vector<1x256xf32> to vector<8x256xf32>
    %49 = arith.mulf %45, %48 : vector<8x256xf32>
    %c16 = arith.constant 16 : index
    %c0_22 = arith.constant 0 : index
    %50 = vector.load %arg7[%c16, %c0_22] : memref<72x256xf32, #tpu.memory_space<vmem>>, vector<8x256xf32>
    tpu.vector_store %arg7[%c16, %c0_22], %49 {strides = array<i32>} : memref<72x256xf32, #tpu.memory_space<vmem>>, vector<8x256xf32>,
    %c1_i32 = arith.constant 1 : i32
    %51 = tpu.dynamic_rotate %3 by %c1_i32 dim 1 : vector<8x256xf32>, i32 -> vector<8x256xf32>
    %52 = arith.mulf %51, %3 : vector<8x256xf32>
    %cst_23 = arith.constant dense<0.000000e+00> : vector<256xf32>
    %53 = vector.multi_reduction <add>, %52, %cst_23 [0] : vector<8x256xf32> to vector<256xf32>
    %54 = vector.shape_cast %53 : vector<256xf32> to vector<1x256xf32>
    %c1_i32_24 = arith.constant 1 : i32
    %55 = tpu.dynamic_rotate %8 by %c1_i32_24 dim 1 : vector<1x256xf32>, i32 -> vector<1x256xf32>
    %56 = arith.addf %55, %8 : vector<1x256xf32>
    %57 = arith.addf %56, %54 : vector<1x256xf32>
    %58 = math.exp %57 : vector<1x256xf32>
    %c1_i32_25 = arith.constant 1 : i32
    %59 = tpu.dynamic_rotate %1 by %c1_i32_25 dim 1 : vector<8x256xf32>, i32 -> vector<8x256xf32>
    %c3 = arith.constant 3 : index
    %c0_26 = arith.constant 0 : index
    %60 = vector.load %arg1[%c3, %c0_26] : memref<16x256xf32, #tpu.memory_space<vmem>>, vector<1x256xf32>
    %61 = arith.mulf %60, %58 : vector<1x256xf32>
    %62 = vector.broadcast %61 : vector<1x256xf32> to vector<8x256xf32>
    %63 = arith.mulf %59, %62 : vector<8x256xf32>
    %c24 = arith.constant 24 : index
    %c0_27 = arith.constant 0 : index
    %64 = vector.load %arg7[%c24, %c0_27] : memref<72x256xf32, #tpu.memory_space<vmem>>, vector<8x256xf32>
    tpu.vector_store %arg7[%c24, %c0_27], %63 {strides = array<i32>} : memref<72x256xf32, #tpu.memory_space<vmem>>, vector<8x256xf32>,
    %c32 = arith.constant 32 : index
    %c0_28 = arith.constant 0 : index
    %65 = vector.load %arg7[%c32, %c0_28] : memref<72x256xf32, #tpu.memory_space<vmem>>, vector<8x256xf32>
    tpu.vector_store %arg7[%c32, %c0_28], %1 {strides = array<i32>} : memref<72x256xf32, #tpu.memory_space<vmem>>, vector<8x256xf32>,
    %c255_i32 = arith.constant 255 : i32
    %66 = tpu.dynamic_rotate %3 by %c255_i32 dim 1 : vector<8x256xf32>, i32 -> vector<8x256xf32>
    %67 = arith.mulf %66, %3 : vector<8x256xf32>
    %cst_29 = arith.constant dense<0.000000e+00> : vector<256xf32>
    %68 = vector.multi_reduction <add>, %67, %cst_29 [0] : vector<8x256xf32> to vector<256xf32>
    %69 = vector.shape_cast %68 : vector<256xf32> to vector<1x256xf32>
    %c255_i32_30 = arith.constant 255 : i32
    %70 = tpu.dynamic_rotate %8 by %c255_i32_30 dim 1 : vector<1x256xf32>, i32 -> vector<1x256xf32>
    %71 = arith.addf %70, %8 : vector<1x256xf32>
    %72 = arith.addf %71, %69 : vector<1x256xf32>
    %73 = math.exp %72 : vector<1x256xf32>
    %c255_i32_31 = arith.constant 255 : i32
    %74 = tpu.dynamic_rotate %1 by %c255_i32_31 dim 1 : vector<8x256xf32>, i32 -> vector<8x256xf32>
    %c5 = arith.constant 5 : index
    %c0_32 = arith.constant 0 : index
    %75 = vector.load %arg1[%c5, %c0_32] : memref<16x256xf32, #tpu.memory_space<vmem>>, vector<1x256xf32>
    %76 = arith.mulf %75, %73 : vector<1x256xf32>
    %77 = vector.broadcast %76 : vector<1x256xf32> to vector<8x256xf32>
    %78 = arith.mulf %74, %77 : vector<8x256xf32>
    %c40 = arith.constant 40 : index
    %c0_33 = arith.constant 0 : index
    %79 = vector.load %arg7[%c40, %c0_33] : memref<72x256xf32, #tpu.memory_space<vmem>>, vector<8x256xf32>
    tpu.vector_store %arg7[%c40, %c0_33], %78 {strides = array<i32>} : memref<72x256xf32, #tpu.memory_space<vmem>>, vector<8x256xf32>,
    %c241_i32 = arith.constant 241 : i32
    %80 = tpu.dynamic_rotate %3 by %c241_i32 dim 1 : vector<8x256xf32>, i32 -> vector<8x256xf32>
    %81 = arith.mulf %80, %3 : vector<8x256xf32>
    %cst_34 = arith.constant dense<0.000000e+00> : vector<256xf32>
    %82 = vector.multi_reduction <add>, %81, %cst_34 [0] : vector<8x256xf32> to vector<256xf32>
    %83 = vector.shape_cast %82 : vector<256xf32> to vector<1x256xf32>
    %c241_i32_35 = arith.constant 241 : i32
    %84 = tpu.dynamic_rotate %8 by %c241_i32_35 dim 1 : vector<1x256xf32>, i32 -> vector<1x256xf32>
    %85 = arith.addf %84, %8 : vector<1x256xf32>
    %86 = arith.addf %85, %83 : vector<1x256xf32>
    %87 = math.exp %86 : vector<1x256xf32>
    %c241_i32_36 = arith.constant 241 : i32
    %88 = tpu.dynamic_rotate %1 by %c241_i32_36 dim 1 : vector<8x256xf32>, i32 -> vector<8x256xf32>
    %c6 = arith.constant 6 : index
    %c0_37 = arith.constant 0 : index
    %89 = vector.load %arg1[%c6, %c0_37] : memref<16x256xf32, #tpu.memory_space<vmem>>, vector<1x256xf32>
    %90 = arith.mulf %89, %87 : vector<1x256xf32>
    %91 = vector.broadcast %90 : vector<1x256xf32> to vector<8x256xf32>
    %92 = arith.mulf %88, %91 : vector<8x256xf32>
    %c48 = arith.constant 48 : index
    %c0_38 = arith.constant 0 : index
    %93 = vector.load %arg7[%c48, %c0_38] : memref<72x256xf32, #tpu.memory_space<vmem>>, vector<8x256xf32>
    tpu.vector_store %arg7[%c48, %c0_38], %92 {strides = array<i32>} : memref<72x256xf32, #tpu.memory_space<vmem>>, vector<8x256xf32>,
    %c240_i32 = arith.constant 240 : i32
    %94 = tpu.dynamic_rotate %3 by %c240_i32 dim 1 : vector<8x256xf32>, i32 -> vector<8x256xf32>
    %95 = arith.mulf %94, %3 : vector<8x256xf32>
    %cst_39 = arith.constant dense<0.000000e+00> : vector<256xf32>
    %96 = vector.multi_reduction <add>, %95, %cst_39 [0] : vector<8x256xf32> to vector<256xf32>
    %97 = vector.shape_cast %96 : vector<256xf32> to vector<1x256xf32>
    %c240_i32_40 = arith.constant 240 : i32
    %98 = tpu.dynamic_rotate %8 by %c240_i32_40 dim 1 : vector<1x256xf32>, i32 -> vector<1x256xf32>
    %99 = arith.addf %98, %8 : vector<1x256xf32>
    %100 = arith.addf %99, %97 : vector<1x256xf32>
    %101 = math.exp %100 : vector<1x256xf32>
    %c240_i32_41 = arith.constant 240 : i32
    %102 = tpu.dynamic_rotate %1 by %c240_i32_41 dim 1 : vector<8x256xf32>, i32 -> vector<8x256xf32>
    %c7 = arith.constant 7 : index
    %c0_42 = arith.constant 0 : index
    %103 = vector.load %arg1[%c7, %c0_42] : memref<16x256xf32, #tpu.memory_space<vmem>>, vector<1x256xf32>
    %104 = arith.mulf %103, %101 : vector<1x256xf32>
    %105 = vector.broadcast %104 : vector<1x256xf32> to vector<8x256xf32>
    %106 = arith.mulf %102, %105 : vector<8x256xf32>
    %c56 = arith.constant 56 : index
    %c0_43 = arith.constant 0 : index
    %107 = vector.load %arg7[%c56, %c0_43] : memref<72x256xf32, #tpu.memory_space<vmem>>, vector<8x256xf32>
    tpu.vector_store %arg7[%c56, %c0_43], %106 {strides = array<i32>} : memref<72x256xf32, #tpu.memory_space<vmem>>, vector<8x256xf32>,
    %c239_i32 = arith.constant 239 : i32
    %108 = tpu.dynamic_rotate %3 by %c239_i32 dim 1 : vector<8x256xf32>, i32 -> vector<8x256xf32>
    %109 = arith.mulf %108, %3 : vector<8x256xf32>
    %cst_44 = arith.constant dense<0.000000e+00> : vector<256xf32>
    %110 = vector.multi_reduction <add>, %109, %cst_44 [0] : vector<8x256xf32> to vector<256xf32>
    %111 = vector.shape_cast %110 : vector<256xf32> to vector<1x256xf32>
    %c239_i32_45 = arith.constant 239 : i32
    %112 = tpu.dynamic_rotate %8 by %c239_i32_45 dim 1 : vector<1x256xf32>, i32 -> vector<1x256xf32>
    %113 = arith.addf %112, %8 : vector<1x256xf32>
    %114 = arith.addf %113, %111 : vector<1x256xf32>
    %115 = math.exp %114 : vector<1x256xf32>
    %c239_i32_46 = arith.constant 239 : i32
    %116 = tpu.dynamic_rotate %1 by %c239_i32_46 dim 1 : vector<8x256xf32>, i32 -> vector<8x256xf32>
    %c8_47 = arith.constant 8 : index
    %c0_48 = arith.constant 0 : index
    %117 = vector.load %arg1[%c8_47, %c0_48] : memref<16x256xf32, #tpu.memory_space<vmem>>, vector<1x256xf32>
    %118 = arith.mulf %117, %115 : vector<1x256xf32>
    %119 = vector.broadcast %118 : vector<1x256xf32> to vector<8x256xf32>
    %120 = arith.mulf %116, %119 : vector<8x256xf32>
    %c64 = arith.constant 64 : index
    %c0_49 = arith.constant 0 : index
    %121 = vector.load %arg7[%c64, %c0_49] : memref<72x256xf32, #tpu.memory_space<vmem>>, vector<8x256xf32>
    tpu.vector_store %arg7[%c64, %c0_49], %120 {strides = array<i32>} : memref<72x256xf32, #tpu.memory_space<vmem>>, vector<8x256xf32>,
    %c0_50 = arith.constant 0 : index
    %c0_51 = arith.constant 0 : index
    %122 = vector.load %arg4[%c0_50, %c0_51] : memref<8x72xf32, #tpu.memory_space<vmem>>, vector<8x72xf32>
    %c0_52 = arith.constant 0 : index
    %c0_53 = arith.constant 0 : index
    %123 = vector.load %arg7[%c0_52, %c0_53] : memref<72x256xf32, #tpu.memory_space<vmem>>, vector<72x256xf32>
    %cst_54 = arith.constant dense<0.000000e+00> : vector<8x256xf32>
    %124 = tpu.matmul %122, %123, %cst_54 {dimension_numbers = #tpu.dot_dimension_numbers<[1], [0], [0], [1], [0, 0, 1, 1], [], []>} : vector<8x72xf32>, vector<72x256xf32>, vector<8x256xf32> -> vector<8x256xf32>
    %cst_55 = arith.constant dense<0.000000e+00> : vector<8xf32>
    %125 = vector.multi_reduction <add>, %124, %cst_55 [1] : vector<8x256xf32> to vector<8xf32>
    %126 = vector.shape_cast %125 : vector<8xf32> to vector<8x1xf32>
    %cst_56 = arith.constant 3.906250e-03 : f32
    %127 = vector.broadcast %cst_56 : f32 to vector<8x1xf32>
    %128 = arith.mulf %126, %127 : vector<8x1xf32>
    %129 = arith.mulf %124, %124 : vector<8x256xf32>
    %cst_57 = arith.constant dense<0.000000e+00> : vector<8xf32>
    %130 = vector.multi_reduction <add>, %129, %cst_57 [1] : vector<8x256xf32> to vector<8xf32>
    %131 = vector.shape_cast %130 : vector<8xf32> to vector<8x1xf32>
    %cst_58 = arith.constant 3.906250e-03 : f32
    %132 = vector.broadcast %cst_58 : f32 to vector<8x1xf32>
    %133 = arith.mulf %131, %132 : vector<8x1xf32>
    %134 = arith.mulf %128, %128 : vector<8x1xf32>
    %135 = arith.subf %133, %134 : vector<8x1xf32>
    %cst_59 = arith.constant 0.000000e+00 : f32
    %136 = vector.broadcast %cst_59 : f32 to vector<8x1xf32>
    %137 = arith.maximumf %135, %136 : vector<8x1xf32>
    %138 = vector.broadcast %128 : vector<8x1xf32> to vector<8x256xf32>
    %139 = arith.subf %124, %138 : vector<8x256xf32>
    %cst_60 = arith.constant 9.99999974E-6 : f32
    %140 = vector.broadcast %cst_60 : f32 to vector<8x1xf32>
    %141 = arith.addf %137, %140 : vector<8x1xf32>
    %142 = math.rsqrt %141 : vector<8x1xf32>
    %143 = vector.broadcast %142 : vector<8x1xf32> to vector<8x256xf32>
    %144 = arith.mulf %139, %143 : vector<8x256xf32>
    %cst_61 = arith.constant 0.000000e+00 : f32
    %145 = vector.broadcast %cst_61 : f32 to vector<8x256xf32>
    %146 = arith.maximumf %144, %145 : vector<8x256xf32>
    %c17_i32_62 = arith.constant 17 : i32
    %147 = tpu.dynamic_rotate %146 by %c17_i32_62 dim 1 : vector<8x256xf32>, i32 -> vector<8x256xf32>
    %c0_63 = arith.constant 0 : index
    %c0_64 = arith.constant 0 : index
    %148 = vector.load %arg1[%c0_63, %c0_64] : memref<16x256xf32, #tpu.memory_space<vmem>>, vector<1x256xf32>
    %149 = vector.broadcast %148 : vector<1x256xf32> to vector<8x256xf32>
    %150 = arith.mulf %147, %149 : vector<8x256xf32>
    %c0_65 = arith.constant 0 : index
    %c0_66 = arith.constant 0 : index
    %151 = vector.load %arg7[%c0_65, %c0_66] : memref<72x256xf32, #tpu.memory_space<vmem>>, vector<8x256xf32>
    tpu.vector_store %arg7[%c0_65, %c0_66], %150 {strides = array<i32>} : memref<72x256xf32, #tpu.memory_space<vmem>>, vector<8x256xf32>,
    %c16_i32_67 = arith.constant 16 : i32
    %152 = tpu.dynamic_rotate %146 by %c16_i32_67 dim 1 : vector<8x256xf32>, i32 -> vector<8x256xf32>
    %c1_68 = arith.constant 1 : index
    %c0_69 = arith.constant 0 : index
    %153 = vector.load %arg1[%c1_68, %c0_69] : memref<16x256xf32, #tpu.memory_space<vmem>>, vector<1x256xf32>
    %154 = vector.broadcast %153 : vector<1x256xf32> to vector<8x256xf32>
    %155 = arith.mulf %152, %154 : vector<8x256xf32>
    %c8_70 = arith.constant 8 : index
    %c0_71 = arith.constant 0 : index
    %156 = vector.load %arg7[%c8_70, %c0_71] : memref<72x256xf32, #tpu.memory_space<vmem>>, vector<8x256xf32>
    tpu.vector_store %arg7[%c8_70, %c0_71], %155 {strides = array<i32>} : memref<72x256xf32, #tpu.memory_space<vmem>>, vector<8x256xf32>,
    %c15_i32_72 = arith.constant 15 : i32
    %157 = tpu.dynamic_rotate %146 by %c15_i32_72 dim 1 : vector<8x256xf32>, i32 -> vector<8x256xf32>
    %c2_73 = arith.constant 2 : index
    %c0_74 = arith.constant 0 : index
    %158 = vector.load %arg1[%c2_73, %c0_74] : memref<16x256xf32, #tpu.memory_space<vmem>>, vector<1x256xf32>
    %159 = vector.broadcast %158 : vector<1x256xf32> to vector<8x256xf32>
    %160 = arith.mulf %157, %159 : vector<8x256xf32>
    %c16_75 = arith.constant 16 : index
    %c0_76 = arith.constant 0 : index
    %161 = vector.load %arg7[%c16_75, %c0_76] : memref<72x256xf32, #tpu.memory_space<vmem>>, vector<8x256xf32>
    tpu.vector_store %arg7[%c16_75, %c0_76], %160 {strides = array<i32>} : memref<72x256xf32, #tpu.memory_space<vmem>>, vector<8x256xf32>,
    %c1_i32_77 = arith.constant 1 : i32
    %162 = tpu.dynamic_rotate %146 by %c1_i32_77 dim 1 : vector<8x256xf32>, i32 -> vector<8x256xf32>
    %c3_78 = arith.constant 3 : index
    %c0_79 = arith.constant 0 : index
    %163 = vector.load %arg1[%c3_78, %c0_79] : memref<16x256xf32, #tpu.memory_space<vmem>>, vector<1x256xf32>
    %164 = vector.broadcast %163 : vector<1x256xf32> to vector<8x256xf32>
    %165 = arith.mulf %162, %164 : vector<8x256xf32>
    %c24_80 = arith.constant 24 : index
    %c0_81 = arith.constant 0 : index
    %166 = vector.load %arg7[%c24_80, %c0_81] : memref<72x256xf32, #tpu.memory_space<vmem>>, vector<8x256xf32>
    tpu.vector_store %arg7[%c24_80, %c0_81], %165 {strides = array<i32>} : memref<72x256xf32, #tpu.memory_space<vmem>>, vector<8x256xf32>,
    %c32_82 = arith.constant 32 : index
    %c0_83 = arith.constant 0 : index
    %167 = vector.load %arg7[%c32_82, %c0_83] : memref<72x256xf32, #tpu.memory_space<vmem>>, vector<8x256xf32>
    tpu.vector_store %arg7[%c32_82, %c0_83], %146 {strides = array<i32>} : memref<72x256xf32, #tpu.memory_space<vmem>>, vector<8x256xf32>,
    %c255_i32_84 = arith.constant 255 : i32
    %168 = tpu.dynamic_rotate %146 by %c255_i32_84 dim 1 : vector<8x256xf32>, i32 -> vector<8x256xf32>
    %c5_85 = arith.constant 5 : index
    %c0_86 = arith.constant 0 : index
    %169 = vector.load %arg1[%c5_85, %c0_86] : memref<16x256xf32, #tpu.memory_space<vmem>>, vector<1x256xf32>
    %170 = vector.broadcast %169 : vector<1x256xf32> to vector<8x256xf32>
    %171 = arith.mulf %168, %170 : vector<8x256xf32>
    %c40_87 = arith.constant 40 : index
    %c0_88 = arith.constant 0 : index
    %172 = vector.load %arg7[%c40_87, %c0_88] : memref<72x256xf32, #tpu.memory_space<vmem>>, vector<8x256xf32>
    tpu.vector_store %arg7[%c40_87, %c0_88], %171 {strides = array<i32>} : memref<72x256xf32, #tpu.memory_space<vmem>>, vector<8x256xf32>,
    %c241_i32_89 = arith.constant 241 : i32
    %173 = tpu.dynamic_rotate %146 by %c241_i32_89 dim 1 : vector<8x256xf32>, i32 -> vector<8x256xf32>
    %c6_90 = arith.constant 6 : index
    %c0_91 = arith.constant 0 : index
    %174 = vector.load %arg1[%c6_90, %c0_91] : memref<16x256xf32, #tpu.memory_space<vmem>>, vector<1x256xf32>
    %175 = vector.broadcast %174 : vector<1x256xf32> to vector<8x256xf32>
    %176 = arith.mulf %173, %175 : vector<8x256xf32>
    %c48_92 = arith.constant 48 : index
    %c0_93 = arith.constant 0 : index
    %177 = vector.load %arg7[%c48_92, %c0_93] : memref<72x256xf32, #tpu.memory_space<vmem>>, vector<8x256xf32>
    tpu.vector_store %arg7[%c48_92, %c0_93], %176 {strides = array<i32>} : memref<72x256xf32, #tpu.memory_space<vmem>>, vector<8x256xf32>,
    %c240_i32_94 = arith.constant 240 : i32
    %178 = tpu.dynamic_rotate %146 by %c240_i32_94 dim 1 : vector<8x256xf32>, i32 -> vector<8x256xf32>
    %c7_95 = arith.constant 7 : index
    %c0_96 = arith.constant 0 : index
    %179 = vector.load %arg1[%c7_95, %c0_96] : memref<16x256xf32, #tpu.memory_space<vmem>>, vector<1x256xf32>
    %180 = vector.broadcast %179 : vector<1x256xf32> to vector<8x256xf32>
    %181 = arith.mulf %178, %180 : vector<8x256xf32>
    %c56_97 = arith.constant 56 : index
    %c0_98 = arith.constant 0 : index
    %182 = vector.load %arg7[%c56_97, %c0_98] : memref<72x256xf32, #tpu.memory_space<vmem>>, vector<8x256xf32>
    tpu.vector_store %arg7[%c56_97, %c0_98], %181 {strides = array<i32>} : memref<72x256xf32, #tpu.memory_space<vmem>>, vector<8x256xf32>,
    %c239_i32_99 = arith.constant 239 : i32
    %183 = tpu.dynamic_rotate %146 by %c239_i32_99 dim 1 : vector<8x256xf32>, i32 -> vector<8x256xf32>
    %c8_100 = arith.constant 8 : index
    %c0_101 = arith.constant 0 : index
    %184 = vector.load %arg1[%c8_100, %c0_101] : memref<16x256xf32, #tpu.memory_space<vmem>>, vector<1x256xf32>
    %185 = vector.broadcast %184 : vector<1x256xf32> to vector<8x256xf32>
    %186 = arith.mulf %183, %185 : vector<8x256xf32>
    %c64_102 = arith.constant 64 : index
    %c0_103 = arith.constant 0 : index
    %187 = vector.load %arg7[%c64_102, %c0_103] : memref<72x256xf32, #tpu.memory_space<vmem>>, vector<8x256xf32>
    tpu.vector_store %arg7[%c64_102, %c0_103], %186 {strides = array<i32>} : memref<72x256xf32, #tpu.memory_space<vmem>>, vector<8x256xf32>,
    %c0_104 = arith.constant 0 : index
    %c0_105 = arith.constant 0 : index
    %188 = vector.load %arg5[%c0_104, %c0_105] : memref<8x72xf32, #tpu.memory_space<vmem>>, vector<8x72xf32>
    %c0_106 = arith.constant 0 : index
    %c0_107 = arith.constant 0 : index
    %189 = vector.load %arg7[%c0_106, %c0_107] : memref<72x256xf32, #tpu.memory_space<vmem>>, vector<72x256xf32>
    %cst_108 = arith.constant dense<0.000000e+00> : vector<8x256xf32>
    %190 = tpu.matmul %188, %189, %cst_108 {dimension_numbers = #tpu.dot_dimension_numbers<[1], [0], [0], [1], [0, 0, 1, 1], [], []>} : vector<8x72xf32>, vector<72x256xf32>, vector<8x256xf32> -> vector<8x256xf32>
    %cst_109 = arith.constant dense<0.000000e+00> : vector<8xf32>
    %191 = vector.multi_reduction <add>, %190, %cst_109 [1] : vector<8x256xf32> to vector<8xf32>
    %192 = vector.shape_cast %191 : vector<8xf32> to vector<8x1xf32>
    %cst_110 = arith.constant 3.906250e-03 : f32
    %193 = vector.broadcast %cst_110 : f32 to vector<8x1xf32>
    %194 = arith.mulf %192, %193 : vector<8x1xf32>
    %195 = arith.mulf %190, %190 : vector<8x256xf32>
    %cst_111 = arith.constant dense<0.000000e+00> : vector<8xf32>
    %196 = vector.multi_reduction <add>, %195, %cst_111 [1] : vector<8x256xf32> to vector<8xf32>
    %197 = vector.shape_cast %196 : vector<8xf32> to vector<8x1xf32>
    %cst_112 = arith.constant 3.906250e-03 : f32
    %198 = vector.broadcast %cst_112 : f32 to vector<8x1xf32>
    %199 = arith.mulf %197, %198 : vector<8x1xf32>
    %200 = arith.mulf %194, %194 : vector<8x1xf32>
    %201 = arith.subf %199, %200 : vector<8x1xf32>
    %cst_113 = arith.constant 0.000000e+00 : f32
    %202 = vector.broadcast %cst_113 : f32 to vector<8x1xf32>
    %203 = arith.maximumf %201, %202 : vector<8x1xf32>
    %204 = vector.broadcast %194 : vector<8x1xf32> to vector<8x256xf32>
    %205 = arith.subf %190, %204 : vector<8x256xf32>
    %cst_114 = arith.constant 9.99999974E-6 : f32
    %206 = vector.broadcast %cst_114 : f32 to vector<8x1xf32>
    %207 = arith.addf %203, %206 : vector<8x1xf32>
    %208 = math.rsqrt %207 : vector<8x1xf32>
    %209 = vector.broadcast %208 : vector<8x1xf32> to vector<8x256xf32>
    %210 = arith.mulf %205, %209 : vector<8x256xf32>
    %cst_115 = arith.constant 0.000000e+00 : f32
    %211 = vector.broadcast %cst_115 : f32 to vector<8x256xf32>
    %212 = arith.maximumf %210, %211 : vector<8x256xf32>
    %c0_116 = arith.constant 0 : index
    %c0_117 = arith.constant 0 : index
    %c0_118 = arith.constant 0 : index
    %213 = vector.load %arg6[%c0_116, %c0_117, %c0_118] : memref<1x8x256xf32, #tpu.memory_space<vmem>>, vector<1x8x256xf32>
    %214 = vector.shape_cast %213 : vector<1x8x256xf32> to vector<8x256xf32>
    %215 = vector.shape_cast %212 : vector<8x256xf32> to vector<1x8x256xf32>
    tpu.vector_store %arg6[%c0_116, %c0_117, %c0_118], %215 {strides = array<i32>} : memref<1x8x256xf32, #tpu.memory_space<vmem>>, vector<1x8x256xf32>,
    return
  }
  func.func @transform_0(%arg0: i32) -> (i32, i32) {
    %c0_i32 = arith.constant 0 : i32
    %c0_i32_0 = arith.constant 0 : i32
    %c0_i32_1 = arith.constant 0 : i32
    return %c0_i32, %c0_i32_0 : i32, i32
  }
  func.func @transform_1(%arg0: i32) -> (i32, i32, i32) {
    %c0_i32 = arith.constant 0 : i32
    %c0_i32_0 = arith.constant 0 : i32
    %c0_i32_1 = arith.constant 0 : i32
    return %arg0, %c0_i32, %c0_i32_0 : i32, i32, i32
  }
  func.func @transform_2(%arg0: i32) -> (i32, i32, i32) {
    %c0_i32 = arith.constant 0 : i32
    %c0_i32_0 = arith.constant 0 : i32
    %c0_i32_1 = arith.constant 0 : i32
    return %arg0, %c0_i32, %c0_i32_0 : i32, i32, i32
  }
  func.func @transform_3(%arg0: i32) -> (i32, i32) {
    %c0_i32 = arith.constant 0 : i32
    %c0_i32_0 = arith.constant 0 : i32
    %c0_i32_1 = arith.constant 0 : i32
    return %c0_i32, %c0_i32_0 : i32, i32
  }
  func.func @transform_4(%arg0: i32) -> (i32, i32) {
    %c0_i32 = arith.constant 0 : i32
    %c0_i32_0 = arith.constant 0 : i32
    %c0_i32_1 = arith.constant 0 : i32
    return %c0_i32, %c0_i32_0 : i32, i32
  }
  func.func @transform_5(%arg0: i32) -> (i32, i32, i32) {
    %c0_i32 = arith.constant 0 : i32
    %c0_i32_0 = arith.constant 0 : i32
    %c0_i32_1 = arith.constant 0 : i32
    return %arg0, %c0_i32, %c0_i32_0 : i32, i32, i32
  }
}

</mosaic_0001>

<llo_original>
// kernel: decoder_forward.1
$region0: #{decoder_forward.1}
  #allocation0 [shape = 'u32[]', space=smem, size = 0x4, offset = 0x4, fixed_abs, tag = 'smem constant byte address 0x4 - core index']
  #allocation1 [shape = 'u32[144,128]{1,0:T(1,128)}', space=vmem, size = 0x12000, scoped, tag = 'internal scratch']
  #allocation2 [shape = 'f32[72,256]{1,0:T(8,128)}', space=vmem, size = 0x12000, scoped, tag = 'scratch operand']
  %s0 = inlined_call_operand.vmem [shape: f32[16,256], index: 0, kind: input, shape index: {}]
  %s1 = inlined_call_operand.vmem [shape: f32[2,8,256], index: 1, kind: input, shape index: {}]
  %s2 = inlined_call_operand.vmem [shape: f32[2,8,256], index: 2, kind: input, shape index: {}]
  %s3 = inlined_call_operand.vmem [shape: f32[8,72], index: 3, kind: input, shape index: {}]
  %s4 = inlined_call_operand.vmem [shape: f32[8,72], index: 4, kind: input, shape index: {}]
  %s5 = inlined_call_operand.vmem [shape: f32[2,8,256], index: 5, kind: output, shape index: {}]
  %s6 = sld [smem:[#allocation0]]
  $region53: #{decoder_forward.1} parent=0
    _
  %s8 = ssub.s32 1, %s6
  %s9 = scalar_select 0, %s8, %s6
  loop: start=0, step=1, limit=4
  $region2: #{decoder_forward.1} parent=0 // loop_pre_header
    _
  $region3: #{decoder_forward.1} parent=0 // loop_header
    %s11 = sphi 0, %s15
    %p12 = scmp.ge.s32.totalorder %s11, 4
    %s19 = sphi 0, %s19
    %s21 = sphi 0, %s19
    %s22 = sphi 0, %s21
    %s36 = sphi 0, %s22
    %s42 = sphi 0, %s44
    %s45 = sphi 0, %s42
    %s46 = sphi 0, %s45
    %s62 = sphi 0, %s46
    %s68 = sphi 0, %s70
    %s71 = sphi 0, %s68
    %s72 = sphi 0, %s71
    %s88 = sphi 0, %s72
    %s92 = sphi 0, %s92
    %s94 = sphi 0, %s92
    %s95 = sphi 0, %s94
    %s109 = sphi 0, %s95
    %s113 = sphi 0, %s113
    %s115 = sphi 0, %s113
    %s116 = sphi 0, %s115
    %s130 = sphi 0, %s116
    %s136 = sphi 0, %s138
    %s139 = sphi 0, %s136
    %s140 = sphi 0, %s139
    %s156 = sphi 0, %s140
  $region4: #{decoder_forward.1} parent=0 // loop_header_branch
    %14 = sbr.rel (%p12) target = $region8
  $region5: #{decoder_forward.1} parent=0 // loop_body
    %s16 = ssub.s32 %s11, 1
    %s17 = ssub.s32 %s11, 2
    %s18 = sadd.s32 %s11, 1
    %s20 = sadd.s32 %s19, 1
    %p23 = scmp.eq.s32.totalorder %s11, 1
    %p24 = scmp.ne.s32.totalorder %s19, %s21
    %p25 = scmp.eq.s32.totalorder %s11, 0
    %p26 = por %p24, %p25
    %p27 = scmp.ne.s32.totalorder %s19, %s21
    %p28 = scmp.eq.s32.totalorder %s16, 1
    %p29 = por %p27, %p28
    %p30 = scmp.ne.s32.totalorder %s21, %s22
    %p31 = scmp.eq.s32.totalorder %s16, 0
    %p32 = por %p30, %p31
    %p33 = scmp.ne.s32.totalorder %s21, %s22
    %p34 = scmp.eq.s32.totalorder %s17, 1
    %p35 = por %p33, %p34
    %p37 = scmp.ne.s32.totalorder %s22, %s36
    %p38 = scmp.eq.s32.totalorder %s17, 0
    %p39 = por %p37, %p38
    %s40 = ssub.s32 %s11, %s18
    %p41 = scmp.eq.s32.totalorder %s40, 0
    %s43 = sadd.s32 %s42, 1
    %s44 = scalar_select %p41, %s42, %s43
    %p47 = pneg %p41
    %p48 = scmp.eq.s32.totalorder %s11, 1
    %p49 = por %p47, %p48
    %p50 = scmp.ne.s32.totalorder %s42, %s45
    %p51 = scmp.eq.s32.totalorder %s11, 0
    %p52 = por %p50, %p51
    %p53 = scmp.ne.s32.totalorder %s42, %s45
    %p54 = scmp.eq.s32.totalorder %s16, 1
    %p55 = por %p53, %p54
    %p56 = scmp.ne.s32.totalorder %s45, %s46
    %p57 = scmp.eq.s32.totalorder %s16, 0
    %p58 = por %p56, %p57
    %p59 = scmp.ne.s32.totalorder %s45, %s46
    %p60 = scmp.eq.s32.totalorder %s17, 1
    %p61 = por %p59, %p60
    %p63 = scmp.ne.s32.totalorder %s46, %s62
    %p64 = scmp.eq.s32.totalorder %s17, 0
    %p65 = por %p63, %p64
    %s66 = ssub.s32 %s11, %s18
    %p67 = scmp.eq.s32.totalorder %s66, 0
    %s69 = sadd.s32 %s68, 1
    %s70 = scalar_select %p67, %s68, %s69
    %p73 = pneg %p67
    %p74 = scmp.eq.s32.totalorder %s11, 1
    %p75 = por %p73, %p74
    %p76 = scmp.ne.s32.totalorder %s68, %s71
    %p77 = scmp.eq.s32.totalorder %s11, 0
    %p78 = por %p76, %p77
    %p79 = scmp.ne.s32.totalorder %s68, %s71
    %p80 = scmp.eq.s32.totalorder %s16, 1
    %p81 = por %p79, %p80
    %p82 = scmp.ne.s32.totalorder %s71, %s72
    %p83 = scmp.eq.s32.totalorder %s16, 0
    %p84 = por %p82, %p83
    %p85 = scmp.ne.s32.totalorder %s71, %s72
    %p86 = scmp.eq.s32.totalorder %s17, 1
    %p87 = por %p85, %p86
    %p89 = scmp.ne.s32.totalorder %s72, %s88
    %p90 = scmp.eq.s32.totalorder %s17, 0
    %p91 = por %p89, %p90
    %s93 = sadd.s32 %s92, 1
    %p96 = scmp.eq.s32.totalorder %s11, 1
    %p97 = scmp.ne.s32.totalorder %s92, %s94
    %p98 = scmp.eq.s32.totalorder %s11, 0
    %p99 = por %p97, %p98
    %p100 = scmp.ne.s32.totalorder %s92, %s94
    %p101 = scmp.eq.s32.totalorder %s16, 1
    %p102 = por %p100, %p101
    %p103 = scmp.ne.s32.totalorder %s94, %s95
    %p104 = scmp.eq.s32.totalorder %s16, 0
    %p105 = por %p103, %p104
    %p106 = scmp.ne.s32.totalorder %s94, %s95
    %p107 = scmp.eq.s32.totalorder %s17, 1
    %p108 = por %p106, %p107
    %p110 = scmp.ne.s32.totalorder %s95, %s109
    %p111 = scmp.eq.s32.totalorder %s17, 0
    %p112 = por %p110, %p111
    %s114 = sadd.s32 %s113, 1
    %p117 = scmp.eq.s32.totalorder %s11, 1
    %p118 = scmp.ne.s32.totalorder %s113, %s115
    %p119 = scmp.eq.s32.totalorder %s11, 0
    %p120 = por %p118, %p119
    %p121 = scmp.ne.s32.totalorder %s113, %s115
    %p122 = scmp.eq.s32.totalorder %s16, 1
    %p123 = por %p121, %p122
    %p124 = scmp.ne.s32.totalorder %s115, %s116
    %p125 = scmp.eq.s32.totalorder %s16, 0
    %p126 = por %p124, %p125
    %p127 = scmp.ne.s32.totalorder %s115, %s116
    %p128 = scmp.eq.s32.totalorder %s17, 1
    %p129 = por %p127, %p128
    %p131 = scmp.ne.s32.totalorder %s116, %s130
    %p132 = scmp.eq.s32.totalorder %s17, 0
    %p133 = por %p131, %p132
    %s134 = ssub.s32 %s11, %s18
    %p135 = scmp.eq.s32.totalorder %s134, 0
    %s137 = sadd.s32 %s136, 1
    %s138 = scalar_select %p135, %s136, %s137
    %p141 = pneg %p135
    %p142 = scmp.eq.s32.totalorder %s11, 1
    %p143 = por %p141, %p142
    %p144 = scmp.ne.s32.totalorder %s136, %s139
    %p145 = scmp.eq.s32.totalorder %s11, 0
    %p146 = por %p144, %p145
    %p147 = scmp.ne.s32.totalorder %s136, %s139
    %p148 = scmp.eq.s32.totalorder %s16, 1
    %p149 = por %p147, %p148
    %p150 = scmp.ne.s32.totalorder %s139, %s140
    %p151 = scmp.eq.s32.totalorder %s16, 0
    %p152 = por %p150, %p151
    %p153 = scmp.ne.s32.totalorder %s139, %s140
    %p154 = scmp.eq.s32.totalorder %s17, 1
    %p155 = por %p153, %p154
    %p157 = scmp.ne.s32.totalorder %s140, %s156
    %p158 = scmp.eq.s32.totalorder %s17, 0
    %p159 = por %p157, %p158
    %p160 = scmp.le.s32.totalorder 1, %s11
    %p161 = scmp.lt.s32.totalorder %s11, 3
    %p162 = pnand %p160, %p161
    %p163 = pneg %p162
    // Predicated region
    $region9: #{decoder_forward.1} parent=5 // pred_check
      _
    $region10: #{decoder_forward.1} parent=5 // pred_check_branch
      %165 = sbr.rel (%p162) target = $region12
    $region11: #{decoder_forward.1} parent=5 // pred_region
      %s166 = ssub.s32 %s11, 1
      // Predicated region
      $region13: #{decoder_forward.1} parent=11 // pred_check
        %p167 = pneg %p32
      $region14: #{decoder_forward.1} parent=11 // pred_check_branch
        %169 = sbr.rel (%p167) target = $region16
      $region15: #{decoder_forward.1} parent=11 // pred_region
        _
      $region16: #{decoder_forward.1} parent=11 // pred_fallthru
        _
      // Predicated region
      $region17: #{decoder_forward.1} parent=11 // pred_check
        %p170 = pneg %p105
      $region18: #{decoder_forward.1} parent=11 // pred_check_branch
        %172 = sbr.rel (%p170) target = $region20
      $region19: #{decoder_forward.1} parent=11 // pred_region
        _
      $region20: #{decoder_forward.1} parent=11 // pred_fallthru
        _
      // Predicated region
      $region21: #{decoder_forward.1} parent=11 // pred_check
        %p173 = pneg %p126
      $region22: #{decoder_forward.1} parent=11 // pred_check_branch
        %175 = sbr.rel (%p173) target = $region24
      $region23: #{decoder_forward.1} parent=11 // pred_region
        _
      $region24: #{decoder_forward.1} parent=11 // pred_fallthru
        _
    $region12: #{decoder_forward.1} parent=5 // pred_fallthru
      _
    %p176 = scmp.lt.s32.totalorder %s11, 2
    // Predicated region
    $region25: #{decoder_forward.1} parent=5 // pred_check
      %p177 = pneg %p176
    $region26: #{decoder_forward.1} parent=5 // pred_check_branch
      %179 = sbr.rel (%p177) target = $region28
    $region27: #{decoder_forward.1} parent=5 // pred_region
      // Predicated region
      $region29: #{decoder_forward.1} parent=27 // pred_check
        %p180 = pneg %p52
      $region30: #{decoder_forward.1} parent=27 // pred_check_branch
        %182 = sbr.rel (%p180) target = $region32
      $region31: #{decoder_forward.1} parent=27 // pred_region
        %p183 = scmp.lt.s32.totalorder %s11, 1
        %s184 = scalar_select %p183, %s11, 1
        %s185 = smul.addr %s184, 2
        %s186 = smul.addr %s185, 8
        %s187 = scalar_lea.vmem %s1, %s186
      $region32: #{decoder_forward.1} parent=27 // pred_fallthru
        _
      // Predicated region
      $region33: #{decoder_forward.1} parent=27 // pred_check
        %p188 = pneg %p78
      $region34: #{decoder_forward.1} parent=27 // pred_check_branch
        %190 = sbr.rel (%p188) target = $region36
      $region35: #{decoder_forward.1} parent=27 // pred_region
        %p191 = scmp.lt.s32.totalorder %s11, 1
        %s192 = scalar_select %p191, %s11, 1
        %s193 = smul.addr %s192, 2
        %s194 = smul.addr %s193, 8
        %s195 = scalar_lea.vmem %s2, %s194
      $region36: #{decoder_forward.1} parent=27 // pred_fallthru
        _
    $region28: #{decoder_forward.1} parent=5 // pred_fallthru
      _
    %p196 = scmp.le.s32.totalorder 1, %s11
    %p197 = scmp.lt.s32.totalorder %s11, 3
    %p198 = pnand %p196, %p197
    %p199 = pneg %p198
    // Predicated region
    $region37: #{decoder_forward.1} parent=5 // pred_check
      _
    $region38: #{decoder_forward.1} parent=5 // pred_check_branch
      %201 = sbr.rel (%p198) target = $region40
    $region39: #{decoder_forward.1} parent=5 // pred_region
      %s202 = ssub.s32 %s11, 1
      %p203 = pneg %p32
      %p204 = pneg %p29
      %p205 = scmp.lt.s32.totalorder %s16, 1
      %s206 = scalar_select %p205, %s16, 1
      %s207 = smul.addr %s206, 2
      %s208 = smul.addr %s207, 8
      %s209 = scalar_lea.vmem %s1, %s208
      %p210 = pneg %p58
      %p211 = pneg %p55
      %p212 = scmp.lt.s32.totalorder %s16, 1
      %s213 = scalar_select %p212, %s16, 1
      %s214 = smul.addr %s213, 2
      %s215 = smul.addr %s214, 8
      %s216 = scalar_lea.vmem %s2, %s215
      %p217 = pneg %p84
      %p218 = pneg %p81
      %p219 = pneg %p105
      %p220 = pneg %p102
      %p221 = pneg %p126
      %p222 = pneg %p123
      %p223 = pneg %p152
      %p224 = pneg %p149
      %p225 = scmp.lt.s32.totalorder %s16, 1
      %s226 = scalar_select %p225, %s16, 1
      %s227 = smul.addr %s226, 2
      %s228 = smul.addr %s227, 8
      %s229 = scalar_lea.vmem %s5, %s228
      %p230 = scmp.lt.s32.totalorder %s16, 1
      %s231 = scalar_select %p230, %s16, 1
      %s232 = smul.addr %s231, 2
      %s233 = smul.addr %s232, 8
      %s234 = scalar_lea.vmem %s1, %s233
      %p235 = scmp.lt.s32.totalorder %s16, 1
      %s236 = scalar_select %p235, %s16, 1
      %s237 = smul.addr %s236, 2
      %s238 = smul.addr %s237, 8
      %s239 = scalar_lea.vmem %s2, %s238
      %p240 = scmp.lt.s32.totalorder %s16, 1
      %s241 = scalar_select %p240, %s16, 1
      %s242 = smul.addr %s241, 2
      %s243 = smul.addr %s242, 8
      %s244 = scalar_lea.vmem %s5, %s243
      %v245 = vld [vmem:[%s234] sm:$0xff]
      %v246 = vld [vmem:[%s234 + $0x8] sm:$0xff]
      %v247 = vld [vmem:[%s239] sm:$0xff]
      %v248 = vld [vmem:[%s239 + $0x8] sm:$0xff]
      %v249 = vmul.f32 %v247, %v247
      %v250 = vmul.f32 %v248, %v248
      %v251 = vrot.slane %v249, 4
      %v252 = vadd.f32 %v249, %v251
      %v253 = vrot.slane %v252, 2
      %v254 = vadd.f32 %v252, %v253
      %v255 = vrot.slane %v254, 1
      %v256 = vadd.f32 %v254, %v255
      %v257 = vrot.slane %v250, 4
      %v258 = vadd.f32 %v250, %v257
      %v259 = vrot.slane %v258, 2
      %v260 = vadd.f32 %v258, %v259
      %v261 = vrot.slane %v260, 1
      %v262 = vadd.f32 %v260, %v261
      %v263 = vmul.f32 %v256, -0.5
      %v264 = vmul.f32 %v262, -0.5
      %265 = vrot.lane.b32.xlu0 %v247, 17
      %v266 = vpop.permute.xlu0 %265
      %267 = vrot.lane.b32.xlu0 %v248, 17
      %v268 = vpop.permute.xlu0 %267
      %v269 = vlaneseq
      %v270 = vand.u32 %v269, 127
      %vm271 = vcmp.lt.s32.totalorder %v270, 17
      %v272 = vsel %vm271, %v266, %v268
      %v273 = vsel %vm271, %v268, %v266
      %v274 = vmul.f32 %v273, %v247
      %v275 = vmul.f32 %v272, %v248
      %v276 = vrot.slane %v274, 4
      %v277 = vadd.f32 %v274, %v276
      %v278 = vrot.slane %v277, 2
      %v279 = vadd.f32 %v277, %v278
      %v280 = vrot.slane %v279, 1
      %v281 = vadd.f32 %v279, %v280
      %v282 = vrot.slane %v275, 4
      %v283 = vadd.f32 %v275, %v282
      %v284 = vrot.slane %v283, 2
      %v285 = vadd.f32 %v283, %v284
      %v286 = vrot.slane %v285, 1
      %v287 = vadd.f32 %v285, %v286
      %288 = vrot.lane.b32.xlu0 %v263, 17
      %v289 = vpop.permute.xlu0 %288
      %290 = vrot.lane.b32.xlu0 %v264, 17
      %v291 = vpop.permute.xlu0 %290
      %v292 = vsel %vm271, %v289, %v291
      %v293 = vsel %vm271, %v291, %v289
      %v294 = vadd.f32 %v293, %v263
      %v295 = vadd.f32 %v292, %v264
      %v296 = vadd.f32 %v294, %v281
      %v297 = vadd.f32 %v295, %v287
      %v298 = vmul.f32 %v296, 1.442695
      %v299 = vpow.pop %v298
      %v300 = vmul.f32 %v297, 1.442695
      %v301 = vpow.pop %v300
      %302 = vrot.lane.b32.xlu0 %v245, 17
      %v303 = vpop.permute.xlu0 %302
      %304 = vrot.lane.b32.xlu0 %v246, 17
      %v305 = vpop.permute.xlu0 %304
      %v306 = vsel %vm271, %v303, %v305
      %v307 = vsel %vm271, %v305, %v303
      %v308 = vld [vmem:[%s0] ss:$8 sm:$0x3]
      %v311 = vcombine.low %v299, %v301
      %v313 = vunpack.c.l.s4 1966171168
      %v314 = vunpack.c.0.s8 %v313
      %v315 = vlaneseq
      %v316 = vshrl.u32 %v315, 7
      %v317 = vsub.s32 %v314, %v316
      %v318 = vrot.slane %v311, %v317
      %v320 = vunpack.c.l.s4 1966171168
      %v321 = vunpack.c.0.s8 %v320
      %v322 = vlaneseq
      %v323 = vshrl.u32 %v322, 7
      %v324 = vsub.s32 %v321, %v323
      %v325 = vrot.slane %v318, %v324
      %v327 = vmul.f32 %v308, %v325
      %v329 = vlaneseq
      %v330 = vshrl.u32 %v329, 7
      %v331 = vsub.s32 0, %v330
      %v332 = vrot.slane %v327, %v331
      %v333 = vlaneseq
      %v334 = vshrl.u32 %v333, 7
      %v335 = vsub.s32 1, %v334
      %v336 = vrot.slane %v327, %v335
      %v339 = vmul.f32 %v307, %v332
      %v340 = vmul.f32 %v306, %v336
      %341 = vst [vmem:[#allocation2] sm:$0xff] %v339
      %342 = vst [vmem:[#allocation2 + $0x8] sm:$0xff] %v340
      %343 = vrot.lane.b32.xlu0 %v247, 16
      %v344 = vpop.permute.xlu0 %343
      %345 = vrot.lane.b32.xlu0 %v248, 16
      %v346 = vpop.permute.xlu0 %345
      %vm347 = vcmp.lt.s32.totalorder %v270, 16
      %v348 = vsel %vm347, %v344, %v346
      %v349 = vsel %vm347, %v346, %v344
      %v350 = vmul.f32 %v349, %v247
      %v351 = vmul.f32 %v348, %v248
      %v352 = vrot.slane %v350, 4
      %v353 = vadd.f32 %v350, %v352
      %v354 = vrot.slane %v353, 2
      %v355 = vadd.f32 %v353, %v354
      %v356 = vrot.slane %v355, 1
      %v357 = vadd.f32 %v355, %v356
      %v358 = vrot.slane %v351, 4
      %v359 = vadd.f32 %v351, %v358
      %v360 = vrot.slane %v359, 2
      %v361 = vadd.f32 %v359, %v360
      %v362 = vrot.slane %v361, 1
      %v363 = vadd.f32 %v361, %v362
      %364 = vrot.lane.b32.xlu0 %v263, 16
      %v365 = vpop.permute.xlu0 %364
      %366 = vrot.lane.b32.xlu0 %v264, 16
      %v367 = vpop.permute.xlu0 %366
      %v368 = vsel %vm347, %v365, %v367
      %v369 = vsel %vm347, %v367, %v365
      %v370 = vadd.f32 %v369, %v263
      %v371 = vadd.f32 %v368, %v264
      %v372 = vadd.f32 %v370, %v357
      %v373 = vadd.f32 %v371, %v363
      %v374 = vmul.f32 %v372, 1.442695
      %v375 = vpow.pop %v374
      %v376 = vmul.f32 %v373, 1.442695
      %v377 = vpow.pop %v376
      %378 = vrot.lane.b32.xlu0 %v245, 16
      %v379 = vpop.permute.xlu0 %378
      %380 = vrot.lane.b32.xlu0 %v246, 16
      %v381 = vpop.permute.xlu0 %380
      %v382 = vsel %vm347, %v379, %v381
      %v383 = vsel %vm347, %v381, %v379
      %s384 = scalar_lea.vmem %s0, 1
      %v385 = vld [vmem:[%s384] ss:$8 sm:$0x3]
      %v388 = vcombine.low %v375, %v377
      %v390 = vunpack.c.l.s4 1966171168
      %v391 = vunpack.c.0.s8 %v390
      %v392 = vlaneseq
      %v393 = vshrl.u32 %v392, 7
      %v394 = vsub.s32 %v391, %v393
      %v395 = vrot.slane %v388, %v394
      %v397 = vunpack.c.l.s4 1966171168
      %v398 = vunpack.c.0.s8 %v397
      %v399 = vlaneseq
      %v400 = vshrl.u32 %v399, 7
      %v401 = vsub.s32 %v398, %v400
      %v402 = vrot.slane %v395, %v401
      %v404 = vmul.f32 %v385, %v402
      %v406 = vlaneseq
      %v407 = vshrl.u32 %v406, 7
      %v408 = vsub.s32 0, %v407
      %v409 = vrot.slane %v404, %v408
      %v410 = vlaneseq
      %v411 = vshrl.u32 %v410, 7
      %v412 = vsub.s32 1, %v411
      %v413 = vrot.slane %v404, %v412
      %v416 = vmul.f32 %v383, %v409
      %v417 = vmul.f32 %v382, %v413
      %418 = vst [vmem:[#allocation2 + $0x10] sm:$0xff] %v416
      %419 = vst [vmem:[#allocation2 + $0x18] sm:$0xff] %v417
      %420 = vrot.lane.b32.xlu0 %v247, 15
      %v421 = vpop.permute.xlu0 %420
      %422 = vrot.lane.b32.xlu0 %v248, 15
      %v423 = vpop.permute.xlu0 %422
      %vm424 = vcmp.lt.s32.totalorder %v270, 15
      %v425 = vsel %vm424, %v421, %v423
      %v426 = vsel %vm424, %v423, %v421
      %v427 = vmul.f32 %v426, %v247
      %v428 = vmul.f32 %v425, %v248
      %v429 = vrot.slane %v427, 4
      %v430 = vadd.f32 %v427, %v429
      %v431 = vrot.slane %v430, 2
      %v432 = vadd.f32 %v430, %v431
      %v433 = vrot.slane %v432, 1
      %v434 = vadd.f32 %v432, %v433
      %v435 = vrot.slane %v428, 4
      %v436 = vadd.f32 %v428, %v435
      %v437 = vrot.slane %v436, 2
      %v438 = vadd.f32 %v436, %v437
      %v439 = vrot.slane %v438, 1
      %v440 = vadd.f32 %v438, %v439
      %441 = vrot.lane.b32.xlu0 %v263, 15
      %v442 = vpop.permute.xlu0 %441
      %443 = vrot.lane.b32.xlu0 %v264, 15
      %v444 = vpop.permute.xlu0 %443
      %v445 = vsel %vm424, %v442, %v444
      %v446 = vsel %vm424, %v444, %v442
      %v447 = vadd.f32 %v446, %v263
      %v448 = vadd.f32 %v445, %v264
      %v449 = vadd.f32 %v447, %v434
      %v450 = vadd.f32 %v448, %v440
      %v451 = vmul.f32 %v449, 1.442695
      %v452 = vpow.pop %v451
      %v453 = vmul.f32 %v450, 1.442695
      %v454 = vpow.pop %v453
      %455 = vrot.lane.b32.xlu0 %v245, 15
      %v456 = vpop.permute.xlu0 %455
      %457 = vrot.lane.b32.xlu0 %v246, 15
      %v458 = vpop.permute.xlu0 %457
      %v459 = vsel %vm424, %v456, %v458
      %v460 = vsel %vm424, %v458, %v456
      %s461 = scalar_lea.vmem %s0, 2
      %v462 = vld [vmem:[%s461] ss:$8 sm:$0x3]
      %v465 = vcombine.low %v452, %v454
      %v467 = vunpack.c.l.s4 1966171168
      %v468 = vunpack.c.0.s8 %v467
      %v469 = vlaneseq
      %v470 = vshrl.u32 %v469, 7
      %v471 = vsub.s32 %v468, %v470
      %v472 = vrot.slane %v465, %v471
      %v474 = vunpack.c.l.s4 1966171168
      %v475 = vunpack.c.0.s8 %v474
      %v476 = vlaneseq
      %v477 = vshrl.u32 %v476, 7
      %v478 = vsub.s32 %v475, %v477
      %v479 = vrot.slane %v472, %v478
      %v481 = vmul.f32 %v462, %v479
      %v483 = vlaneseq
      %v484 = vshrl.u32 %v483, 7
      %v485 = vsub.s32 0, %v484
      %v486 = vrot.slane %v481, %v485
      %v487 = vlaneseq
      %v488 = vshrl.u32 %v487, 7
      %v489 = vsub.s32 1, %v488
      %v490 = vrot.slane %v481, %v489
      %v493 = vmul.f32 %v460, %v486
      %v494 = vmul.f32 %v459, %v490
      %495 = vst [vmem:[#allocation2 + $0x20] sm:$0xff] %v493
      %496 = vst [vmem:[#allocation2 + $0x28] sm:$0xff] %v494
      %497 = vrot.lane.b32.xlu0 %v247, 1
      %v498 = vpop.permute.xlu0 %497
      %499 = vrot.lane.b32.xlu0 %v248, 1
      %v500 = vpop.permute.xlu0 %499
      %vm501 = vcmp.lt.s32.totalorder %v270, 1
      %v502 = vsel %vm501, %v498, %v500
      %v503 = vsel %vm501, %v500, %v498
      %v504 = vmul.f32 %v503, %v247
      %v505 = vmul.f32 %v502, %v248
      %v506 = vrot.slane %v504, 4
      %v507 = vadd.f32 %v504, %v506
      %v508 = vrot.slane %v507, 2
      %v509 = vadd.f32 %v507, %v508
      %v510 = vrot.slane %v509, 1
      %v511 = vadd.f32 %v509, %v510
      %v512 = vrot.slane %v505, 4
      %v513 = vadd.f32 %v505, %v512
      %v514 = vrot.slane %v513, 2
      %v515 = vadd.f32 %v513, %v514
      %v516 = vrot.slane %v515, 1
      %v517 = vadd.f32 %v515, %v516
      %518 = vrot.lane.b32.xlu0 %v263, 1
      %v519 = vpop.permute.xlu0 %518
      %520 = vrot.lane.b32.xlu0 %v264, 1
      %v521 = vpop.permute.xlu0 %520
      %v522 = vsel %vm501, %v519, %v521
      %v523 = vsel %vm501, %v521, %v519
      %v524 = vadd.f32 %v523, %v263
      %v525 = vadd.f32 %v522, %v264
      %v526 = vadd.f32 %v524, %v511
      %v527 = vadd.f32 %v525, %v517
      %v528 = vmul.f32 %v526, 1.442695
      %v529 = vpow.pop %v528
      %v530 = vmul.f32 %v527, 1.442695
      %v531 = vpow.pop %v530
      %532 = vrot.lane.b32.xlu0 %v245, 1
      %v533 = vpop.permute.xlu0 %532
      %534 = vrot.lane.b32.xlu0 %v246, 1
      %v535 = vpop.permute.xlu0 %534
      %v536 = vsel %vm501, %v533, %v535
      %v537 = vsel %vm501, %v535, %v533
      %s538 = scalar_lea.vmem %s0, 3
      %v539 = vld [vmem:[%s538] ss:$8 sm:$0x3]
      %v542 = vcombine.low %v529, %v531
      %v544 = vunpack.c.l.s4 1966171168
      %v545 = vunpack.c.0.s8 %v544
      %v546 = vlaneseq
      %v547 = vshrl.u32 %v546, 7
      %v548 = vsub.s32 %v545, %v547
      %v549 = vrot.slane %v542, %v548
      %v551 = vunpack.c.l.s4 1966171168
      %v552 = vunpack.c.0.s8 %v551
      %v553 = vlaneseq
      %v554 = vshrl.u32 %v553, 7
      %v555 = vsub.s32 %v552, %v554
      %v556 = vrot.slane %v549, %v555
      %v558 = vmul.f32 %v539, %v556
      %v560 = vlaneseq
      %v561 = vshrl.u32 %v560, 7
      %v562 = vsub.s32 0, %v561
      %v563 = vrot.slane %v558, %v562
      %v564 = vlaneseq
      %v565 = vshrl.u32 %v564, 7
      %v566 = vsub.s32 1, %v565
      %v567 = vrot.slane %v558, %v566
      %v570 = vmul.f32 %v537, %v563
      %v571 = vmul.f32 %v536, %v567
      %572 = vst [vmem:[#allocation2 + $0x30] sm:$0xff] %v570
      %573 = vst [vmem:[#allocation2 + $0x38] sm:$0xff] %v571
      %574 = vst [vmem:[#allocation2 + $0x40] sm:$0xff] %v245
      %575 = vst [vmem:[#allocation2 + $0x48] sm:$0xff] %v246
      %576 = vrot.lane.b32.xlu0 %v247, 127
      %v577 = vpop.permute.xlu0 %576
      %578 = vrot.lane.b32.xlu0 %v248, 127
      %v579 = vpop.permute.xlu0 %578
      %vm580 = vcmp.lt.s32.totalorder %v270, 127
      %v581 = vsel %vm580, %v577, %v579
      %v582 = vsel %vm580, %v579, %v577
      %v583 = vmul.f32 %v581, %v247
      %v584 = vmul.f32 %v582, %v248
      %v585 = vrot.slane %v583, 4
      %v586 = vadd.f32 %v583, %v585
      %v587 = vrot.slane %v586, 2
      %v588 = vadd.f32 %v586, %v587
      %v589 = vrot.slane %v588, 1
      %v590 = vadd.f32 %v588, %v589
      %v591 = vrot.slane %v584, 4
      %v592 = vadd.f32 %v584, %v591
      %v593 = vrot.slane %v592, 2
      %v594 = vadd.f32 %v592, %v593
      %v595 = vrot.slane %v594, 1
      %v596 = vadd.f32 %v594, %v595
      %597 = vrot.lane.b32.xlu0 %v263, 127
      %v598 = vpop.permute.xlu0 %597
      %599 = vrot.lane.b32.xlu0 %v264, 127
      %v600 = vpop.permute.xlu0 %599
      %v601 = vsel %vm580, %v598, %v600
      %v602 = vsel %vm580, %v600, %v598
      %v603 = vadd.f32 %v601, %v263
      %v604 = vadd.f32 %v602, %v264
      %v605 = vadd.f32 %v603, %v590
      %v606 = vadd.f32 %v604, %v596
      %v607 = vmul.f32 %v605, 1.442695
      %v608 = vpow.pop %v607
      %v609 = vmul.f32 %v606, 1.442695
      %v610 = vpow.pop %v609
      %611 = vrot.lane.b32.xlu0 %v245, 127
      %v612 = vpop.permute.xlu0 %611
      %613 = vrot.lane.b32.xlu0 %v246, 127
      %v614 = vpop.permute.xlu0 %613
      %v615 = vsel %vm580, %v612, %v614
      %v616 = vsel %vm580, %v614, %v612
      %s617 = scalar_lea.vmem %s0, 5
      %v618 = vld [vmem:[%s617] ss:$8 sm:$0x3]
      %v621 = vcombine.low %v608, %v610
      %v623 = vunpack.c.l.s4 1966171168
      %v624 = vunpack.c.0.s8 %v623
      %v625 = vlaneseq
      %v626 = vshrl.u32 %v625, 7
      %v627 = vsub.s32 %v624, %v626
      %v628 = vrot.slane %v621, %v627
      %v630 = vunpack.c.l.s4 1966171168
      %v631 = vunpack.c.0.s8 %v630
      %v632 = vlaneseq
      %v633 = vshrl.u32 %v632, 7
      %v634 = vsub.s32 %v631, %v633
      %v635 = vrot.slane %v628, %v634
      %v637 = vmul.f32 %v618, %v635
      %v639 = vlaneseq
      %v640 = vshrl.u32 %v639, 7
      %v641 = vsub.s32 0, %v640
      %v642 = vrot.slane %v637, %v641
      %v643 = vlaneseq
      %v644 = vshrl.u32 %v643, 7
      %v645 = vsub.s32 1, %v644
      %v646 = vrot.slane %v637, %v645
      %v649 = vmul.f32 %v615, %v642
      %v650 = vmul.f32 %v616, %v646
      %651 = vst [vmem:[#allocation2 + $0x50] sm:$0xff] %v649
      %652 = vst [vmem:[#allocation2 + $0x58] sm:$0xff] %v650
      %653 = vrot.lane.b32.xlu0 %v247, 113
      %v654 = vpop.permute.xlu0 %653
      %655 = vrot.lane.b32.xlu0 %v248, 113
      %v656 = vpop.permute.xlu0 %655
      %vm657 = vcmp.lt.s32.totalorder %v270, 113
      %v658 = vsel %vm657, %v654, %v656
      %v659 = vsel %vm657, %v656, %v654
      %v660 = vmul.f32 %v658, %v247
      %v661 = vmul.f32 %v659, %v248
      %v662 = vrot.slane %v660, 4
      %v663 = vadd.f32 %v660, %v662
      %v664 = vrot.slane %v663, 2
      %v665 = vadd.f32 %v663, %v664
      %v666 = vrot.slane %v665, 1
      %v667 = vadd.f32 %v665, %v666
      %v668 = vrot.slane %v661, 4
      %v669 = vadd.f32 %v661, %v668
      %v670 = vrot.slane %v669, 2
      %v671 = vadd.f32 %v669, %v670
      %v672 = vrot.slane %v671, 1
      %v673 = vadd.f32 %v671, %v672
      %674 = vrot.lane.b32.xlu0 %v263, 113
      %v675 = vpop.permute.xlu0 %674
      %676 = vrot.lane.b32.xlu0 %v264, 113
      %v677 = vpop.permute.xlu0 %676
      %v678 = vsel %vm657, %v675, %v677
      %v679 = vsel %vm657, %v677, %v675
      %v680 = vadd.f32 %v678, %v263
      %v681 = vadd.f32 %v679, %v264
      %v682 = vadd.f32 %v680, %v667
      %v683 = vadd.f32 %v681, %v673
      %v684 = vmul.f32 %v682, 1.442695
      %v685 = vpow.pop %v684
      %v686 = vmul.f32 %v683, 1.442695
      %v687 = vpow.pop %v686
      %688 = vrot.lane.b32.xlu0 %v245, 113
      %v689 = vpop.permute.xlu0 %688
      %690 = vrot.lane.b32.xlu0 %v246, 113
      %v691 = vpop.permute.xlu0 %690
      %v692 = vsel %vm657, %v689, %v691
      %v693 = vsel %vm657, %v691, %v689
      %s694 = scalar_lea.vmem %s0, 6
      %v695 = vld [vmem:[%s694] ss:$8 sm:$0x3]
      %v698 = vcombine.low %v685, %v687
      %v700 = vunpack.c.l.s4 1966171168
      %v701 = vunpack.c.0.s8 %v700
      %v702 = vlaneseq
      %v703 = vshrl.u32 %v702, 7
      %v704 = vsub.s32 %v701, %v703
      %v705 = vrot.slane %v698, %v704
      %v707 = vunpack.c.l.s4 1966171168
      %v708 = vunpack.c.0.s8 %v707
      %v709 = vlaneseq
      %v710 = vshrl.u32 %v709, 7
      %v711 = vsub.s32 %v708, %v710
      %v712 = vrot.slane %v705, %v711
      %v714 = vmul.f32 %v695, %v712
      %v716 = vlaneseq
      %v717 = vshrl.u32 %v716, 7
      %v718 = vsub.s32 0, %v717
      %v719 = vrot.slane %v714, %v718
      %v720 = vlaneseq
      %v721 = vshrl.u32 %v720, 7
      %v722 = vsub.s32 1, %v721
      %v723 = vrot.slane %v714, %v722
      %v726 = vmul.f32 %v692, %v719
      %v727 = vmul.f32 %v693, %v723
      %728 = vst [vmem:[#allocation2 + $0x60] sm:$0xff] %v726
      %729 = vst [vmem:[#allocation2 + $0x68] sm:$0xff] %v727
      %730 = vrot.lane.b32.xlu0 %v247, 112
      %v731 = vpop.permute.xlu0 %730
      %732 = vrot.lane.b32.xlu0 %v248, 112
      %v733 = vpop.permute.xlu0 %732
      %vm734 = vcmp.lt.s32.totalorder %v270, 112
      %v735 = vsel %vm734, %v731, %v733
      %v736 = vsel %vm734, %v733, %v731
      %v737 = vmul.f32 %v735, %v247
      %v738 = vmul.f32 %v736, %v248
      %v739 = vrot.slane %v737, 4
      %v740 = vadd.f32 %v737, %v739
      %v741 = vrot.slane %v740, 2
      %v742 = vadd.f32 %v740, %v741
      %v743 = vrot.slane %v742, 1
      %v744 = vadd.f32 %v742, %v743
      %v745 = vrot.slane %v738, 4
      %v746 = vadd.f32 %v738, %v745
      %v747 = vrot.slane %v746, 2
      %v748 = vadd.f32 %v746, %v747
      %v749 = vrot.slane %v748, 1
      %v750 = vadd.f32 %v748, %v749
      %751 = vrot.lane.b32.xlu0 %v263, 112
      %v752 = vpop.permute.xlu0 %751
      %753 = vrot.lane.b32.xlu0 %v264, 112
      %v754 = vpop.permute.xlu0 %753
      %v755 = vsel %vm734, %v752, %v754
      %v756 = vsel %vm734, %v754, %v752
      %v757 = vadd.f32 %v755, %v263
      %v758 = vadd.f32 %v756, %v264
      %v759 = vadd.f32 %v757, %v744
      %v760 = vadd.f32 %v758, %v750
      %v761 = vmul.f32 %v759, 1.442695
      %v762 = vpow.pop %v761
      %v763 = vmul.f32 %v760, 1.442695
      %v764 = vpow.pop %v763
      %765 = vrot.lane.b32.xlu0 %v245, 112
      %v766 = vpop.permute.xlu0 %765
      %767 = vrot.lane.b32.xlu0 %v246, 112
      %v768 = vpop.permute.xlu0 %767
      %v769 = vsel %vm734, %v766, %v768
      %v770 = vsel %vm734, %v768, %v766
      %s771 = scalar_lea.vmem %s0, 7
      %v772 = vld [vmem:[%s771] ss:$8 sm:$0x3]
      %v775 = vcombine.low %v762, %v764
      %v777 = vunpack.c.l.s4 1966171168
      %v778 = vunpack.c.0.s8 %v777
      %v779 = vlaneseq
      %v780 = vshrl.u32 %v779, 7
      %v781 = vsub.s32 %v778, %v780
      %v782 = vrot.slane %v775, %v781
      %v784 = vunpack.c.l.s4 1966171168
      %v785 = vunpack.c.0.s8 %v784
      %v786 = vlaneseq
      %v787 = vshrl.u32 %v786, 7
      %v788 = vsub.s32 %v785, %v787
      %v789 = vrot.slane %v782, %v788
      %v791 = vmul.f32 %v772, %v789
      %v793 = vlaneseq
      %v794 = vshrl.u32 %v793, 7
      %v795 = vsub.s32 0, %v794
      %v796 = vrot.slane %v791, %v795
      %v797 = vlaneseq
      %v798 = vshrl.u32 %v797, 7
      %v799 = vsub.s32 1, %v798
      %v800 = vrot.slane %v791, %v799
      %v803 = vmul.f32 %v769, %v796
      %v804 = vmul.f32 %v770, %v800
      %805 = vst [vmem:[#allocation2 + $0x70] sm:$0xff] %v803
      %806 = vst [vmem:[#allocation2 + $0x78] sm:$0xff] %v804
      %807 = vrot.lane.b32.xlu0 %v247, 111
      %v808 = vpop.permute.xlu0 %807
      %809 = vrot.lane.b32.xlu0 %v248, 111
      %v810 = vpop.permute.xlu0 %809
      %vm811 = vcmp.lt.s32.totalorder %v270, 111
      %v812 = vsel %vm811, %v808, %v810
      %v813 = vsel %vm811, %v810, %v808
      %v814 = vmul.f32 %v812, %v247
      %v815 = vmul.f32 %v813, %v248
      %v816 = vrot.slane %v814, 4
      %v817 = vadd.f32 %v814, %v816
      %v818 = vrot.slane %v817, 2
      %v819 = vadd.f32 %v817, %v818
      %v820 = vrot.slane %v819, 1
      %v821 = vadd.f32 %v819, %v820
      %v822 = vrot.slane %v815, 4
      %v823 = vadd.f32 %v815, %v822
      %v824 = vrot.slane %v823, 2
      %v825 = vadd.f32 %v823, %v824
      %v826 = vrot.slane %v825, 1
      %v827 = vadd.f32 %v825, %v826
      %828 = vrot.lane.b32.xlu0 %v263, 111
      %v829 = vpop.permute.xlu0 %828
      %830 = vrot.lane.b32.xlu0 %v264, 111
      %v831 = vpop.permute.xlu0 %830
      %v832 = vsel %vm811, %v829, %v831
      %v833 = vsel %vm811, %v831, %v829
      %v834 = vadd.f32 %v832, %v263
      %v835 = vadd.f32 %v833, %v264
      %v836 = vadd.f32 %v834, %v821
      %v837 = vadd.f32 %v835, %v827
      %v838 = vmul.f32 %v836, 1.442695
      %v839 = vpow.pop %v838
      %v840 = vmul.f32 %v837, 1.442695
      %v841 = vpow.pop %v840
      %842 = vrot.lane.b32.xlu0 %v245, 111
      %v843 = vpop.permute.xlu0 %842
      %844 = vrot.lane.b32.xlu0 %v246, 111
      %v845 = vpop.permute.xlu0 %844
      %v846 = vsel %vm811, %v843, %v845
      %v847 = vsel %vm811, %v845, %v843
      %s848 = scalar_lea.vmem %s0, 16
      %v849 = vld [vmem:[%s848] ss:$8 sm:$0x3]
      %v852 = vcombine.low %v839, %v841
      %v854 = vunpack.c.l.s4 1966171168
      %v855 = vunpack.c.0.s8 %v854
      %v856 = vlaneseq
      %v857 = vshrl.u32 %v856, 7
      %v858 = vsub.s32 %v855, %v857
      %v859 = vrot.slane %v852, %v858
      %v861 = vunpack.c.l.s4 1966171168
      %v862 = vunpack.c.0.s8 %v861
      %v863 = vlaneseq
      %v864 = vshrl.u32 %v863, 7
      %v865 = vsub.s32 %v862, %v864
      %v866 = vrot.slane %v859, %v865
      %v868 = vmul.f32 %v849, %v866
      %v870 = vlaneseq
      %v871 = vshrl.u32 %v870, 7
      %v872 = vsub.s32 0, %v871
      %v873 = vrot.slane %v868, %v872
      %v874 = vlaneseq
      %v875 = vshrl.u32 %v874, 7
      %v876 = vsub.s32 1, %v875
      %v877 = vrot.slane %v868, %v876
      %v880 = vmul.f32 %v846, %v873
      %v881 = vmul.f32 %v847, %v877
      %882 = vst [vmem:[#allocation2 + $0x80] sm:$0xff] %v880
      %883 = vst [vmem:[#allocation2 + $0x88] sm:$0xff] %v881
      %v884 = vld [vmem:[%s3] sm:$0xff]
      %v885 = vld [vmem:[#allocation2] sm:$0xff]
      %v886 = vld [vmem:[#allocation2 + $0x8] sm:$0xff]
      %v887 = vld [vmem:[#allocation2 + $0x10] sm:$0xff]
      %v888 = vld [vmem:[#allocation2 + $0x18] sm:$0xff]
      %v889 = vld [vmem:[#allocation2 + $0x20] sm:$0xff]
      %v890 = vld [vmem:[#allocation2 + $0x28] sm:$0xff]
      %v891 = vld [vmem:[#allocation2 + $0x30] sm:$0xff]
      %v892 = vld [vmem:[#allocation2 + $0x38] sm:$0xff]
      %v893 = vld [vmem:[#allocation2 + $0x40] sm:$0xff]
      %v894 = vld [vmem:[#allocation2 + $0x48] sm:$0xff]
      %v895 = vld [vmem:[#allocation2 + $0x50] sm:$0xff]
      %v896 = vld [vmem:[#allocation2 + $0x58] sm:$0xff]
      %v897 = vld [vmem:[#allocation2 + $0x60] sm:$0xff]
      %v898 = vld [vmem:[#allocation2 + $0x68] sm:$0xff]
      %v899 = vld [vmem:[#allocation2 + $0x70] sm:$0xff]
      %v900 = vld [vmem:[#allocation2 + $0x78] sm:$0xff]
      %v901 = vld [vmem:[#allocation2 + $0x80] sm:$0xff]
      %v902 = vld [vmem:[#allocation2 + $0x88] sm:$0xff]
      %vm903 = vcmask 588800
      %v905 = vsel %vm903, %v884, 0
      %907 = vmatprep.subr.mxu0 %v886
      %908 = vmatpush1.msra.mxu0 %v885
      %909 = vmatprep.subr.mxu0 %v888
      %910 = vmatpush1.msra.mxu0 %v887
      %911 = vmatprep.subr.mxu0 %v890
      %912 = vmatpush1.msra.mxu0 %v889
      %913 = vmatprep.subr.mxu0 %v892
      %914 = vmatpush1.msra.mxu0 %v891
      %915 = vmatprep.subr.mxu0 %v894
      %916 = vmatpush1.msra.mxu0 %v893
      %917 = vmatprep.subr.mxu0 %v896
      %918 = vmatpush1.msra.mxu0 %v895
      %919 = vmatprep.subr.mxu0 %v898
      %920 = vmatpush1.msra.mxu0 %v897
      %921 = vmatprep.subr.mxu0 %v900
      %922 = vmatpush1.msra.mxu0 %v899
      %923 = vmatprep.subr.mxu0 %v902
      %924 = vmatpush1.msra.mxu0 %v901
      %925 = vmatprep.subr.mxu0 0.0
      %926 = vmatpush1.msra.mxu0 0.0
      %927 = vmatprep.subr.mxu0 0.0
      %928 = vmatpush1.msra.mxu0 0.0
      %929 = vmatprep.subr.mxu0 0.0
      %930 = vmatpush1.msra.mxu0 0.0
      %931 = vmatprep.subr.mxu0 0.0
      %932 = vmatpush1.msra.mxu0 0.0
      %933 = vmatprep.subr.mxu0 0.0
      %934 = vmatpush1.msra.mxu0 0.0
      %935 = vmatprep.subr.mxu0 0.0
      %936 = vmatpush1.msra.mxu0 0.0
      %937 = vmatprep.subr.mxu0 0.0
      %938 = vmatpush1.msra.mxu0 0.0
      %939 = vmatprep.subr.mxu0 0.0
      %940 = vmatpush1.msra.mxu0 0.0
      %941 = vmatprep.subr.mxu0 0.0
      %942 = vmatpush1.msra.mxu0 0.0
      %943 = vmatprep.subr.mxu0 0.0
      %944 = vmatpush1.msra.mxu0 0.0
      %945 = vmatprep.subr.mxu0 0.0
      %946 = vmatpush1.msra.mxu0 0.0
      %947 = vmatprep.subr.mxu0 0.0
      %948 = vmatpush1.msra.mxu0 0.0
      %949 = vmatprep.subr.mxu0 0.0
      %950 = vmatpush1.msra.mxu0 0.0
      %951 = vmatprep.subr.mxu0 0.0
      %952 = vmatpush1.msra.mxu0 0.0
      %953 = vmatprep.subr.mxu0 0.0
      %954 = vmatpush1.msra.mxu0 0.0
      %955 = vmatprep.subr.mxu0 0.0
      %956 = vmatpush1.msra.mxu0 0.0
      %957 = vmatprep.subr.mxu0 0.0
      %958 = vmatpush1.msra.mxu0 0.0
      %959 = vmatprep.subr.mxu0 0.0
      %960 = vmatpush1.msra.mxu0 0.0
      %961 = vmatprep.subr.mxu0 0.0
      %962 = vmatpush1.msra.mxu0 0.0
      %963 = vmatprep.subr.mxu0 0.0
      %964 = vmatpush1.msra.mxu0 0.0
      %965 = vmatprep.subr.mxu0 0.0
      %966 = vmatpush1.msra.mxu0 0.0
      %967 = vmatprep.subr.mxu0 0.0
      %968 = vmatpush1.msra.mxu0 0.0
      %969 = vmatprep.subr.mxu0 0.0
      %970 = vmatpush1.msra.mxu0 0.0
      %971 = vmatprep.mubr.f32.mxu0 0.0
      %972 = vmatmul.mubr.f32.gmra.mrb[0].mxu0 %v905
      %v973 = vpop.f32.mrb[0].mxu0
      %v974 = vadd.f32 0.0, %v973
      %v975 = vpop.f32.mrb[0].mxu0
      %v976 = vadd.f32 0.0, %v975
      %977 = vdwg.mxu0
      %v978 = vadd.f32 %v974, %v976
      %979 = vadd.xlane.f32.xlu0 %v978
      %v980 = vpop.xlane.xlu0 %979
      %v981 = vmul.f32 %v980, 0.00390625
      %v982 = vmul.f32 %v974, %v974
      %v983 = vmul.f32 %v976, %v976
      %v984 = vadd.f32 %v982, %v983
      %985 = vadd.xlane.f32.xlu0 %v984
      %v986 = vpop.xlane.xlu0 %985
      %v987 = vmul.f32 %v986, 0.00390625
      %v988 = vmul.f32 %v981, %v981
      %v989 = vsub.f32 %v987, %v988
      %v990 = vmax.f32 %v989, 0.0
      %v991 = vsub.f32 %v974, %v981
      %v992 = vsub.f32 %v976, %v981
      %v993 = vadd.f32 %v990, 1e-05
      %v994 = vrsqrt.pop %v993
      %v995 = vmul.f32 %v991, %v994
      %v996 = vmul.f32 %v992, %v994
      %v997 = vmax.f32 %v995, 0.0
      %v998 = vmax.f32 %v996, 0.0
      %999 = vrot.lane.b32.xlu0 %v997, 17
      %v1000 = vpop.permute.xlu0 %999
      %1001 = vrot.lane.b32.xlu0 %v998, 17
      %v1002 = vpop.permute.xlu0 %1001
      %v1003 = vsel %vm271, %v1000, %v1002
      %v1004 = vsel %vm271, %v1002, %v1000
      %v1005 = vld [vmem:[%s0] ss:$8 sm:$0x3]
      %v1007 = vlaneseq
      %v1008 = vshrl.u32 %v1007, 7
      %v1009 = vsub.s32 0, %v1008
      %v1010 = vrot.slane %v1005, %v1009
      %v1011 = vlaneseq
      %v1012 = vshrl.u32 %v1011, 7
      %v1013 = vsub.s32 1, %v1012
      %v1014 = vrot.slane %v1005, %v1013
      %v1017 = vmul.f32 %v1004, %v1010
      %v1018 = vmul.f32 %v1003, %v1014
      %1019 = vst [vmem:[#allocation2] sm:$0xff] %v1017
      %1020 = vst [vmem:[#allocation2 + $0x8] sm:$0xff] %v1018
      %1021 = vrot.lane.b32.xlu0 %v997, 16
      %v1022 = vpop.permute.xlu0 %1021
      %1023 = vrot.lane.b32.xlu0 %v998, 16
      %v1024 = vpop.permute.xlu0 %1023
      %v1025 = vsel %vm347, %v1022, %v1024
      %v1026 = vsel %vm347, %v1024, %v1022
      %v1027 = vld [vmem:[%s384] ss:$8 sm:$0x3]
      %v1029 = vlaneseq
      %v1030 = vshrl.u32 %v1029, 7
      %v1031 = vsub.s32 0, %v1030
      %v1032 = vrot.slane %v1027, %v1031
      %v1033 = vlaneseq
      %v1034 = vshrl.u32 %v1033, 7
      %v1035 = vsub.s32 1, %v1034
      %v1036 = vrot.slane %v1027, %v1035
      %v1039 = vmul.f32 %v1026, %v1032
      %v1040 = vmul.f32 %v1025, %v1036
      %1041 = vst [vmem:[#allocation2 + $0x10] sm:$0xff] %v1039
      %1042 = vst [vmem:[#allocation2 + $0x18] sm:$0xff] %v1040
      %1043 = vrot.lane.b32.xlu0 %v997, 15
      %v1044 = vpop.permute.xlu0 %1043
      %1045 = vrot.lane.b32.xlu0 %v998, 15
      %v1046 = vpop.permute.xlu0 %1045
      %v1047 = vsel %vm424, %v1044, %v1046
      %v1048 = vsel %vm424, %v1046, %v1044
      %v1049 = vld [vmem:[%s461] ss:$8 sm:$0x3]
      %v1051 = vlaneseq
      %v1052 = vshrl.u32 %v1051, 7
      %v1053 = vsub.s32 0, %v1052
      %v1054 = vrot.slane %v1049, %v1053
      %v1055 = vlaneseq
      %v1056 = vshrl.u32 %v1055, 7
      %v1057 = vsub.s32 1, %v1056
      %v1058 = vrot.slane %v1049, %v1057
      %v1061 = vmul.f32 %v1048, %v1054
      %v1062 = vmul.f32 %v1047, %v1058
      %1063 = vst [vmem:[#allocation2 + $0x20] sm:$0xff] %v1061
      %1064 = vst [vmem:[#allocation2 + $0x28] sm:$0xff] %v1062
      %1065 = vrot.lane.b32.xlu0 %v997, 1
      %v1066 = vpop.permute.xlu0 %1065
      %1067 = vrot.lane.b32.xlu0 %v998, 1
      %v1068 = vpop.permute.xlu0 %1067
      %v1069 = vsel %vm501, %v1066, %v1068
      %v1070 = vsel %vm501, %v1068, %v1066
      %v1071 = vld [vmem:[%s538] ss:$8 sm:$0x3]
      %v1073 = vlaneseq
      %v1074 = vshrl.u32 %v1073, 7
      %v1075 = vsub.s32 0, %v1074
      %v1076 = vrot.slane %v1071, %v1075
      %v1077 = vlaneseq
      %v1078 = vshrl.u32 %v1077, 7
      %v1079 = vsub.s32 1, %v1078
      %v1080 = vrot.slane %v1071, %v1079
      %v1083 = vmul.f32 %v1070, %v1076
      %v1084 = vmul.f32 %v1069, %v1080
      %1085 = vst [vmem:[#allocation2 + $0x30] sm:$0xff] %v1083
      %1086 = vst [vmem:[#allocation2 + $0x38] sm:$0xff] %v1084
      %1087 = vst [vmem:[#allocation2 + $0x40] sm:$0xff] %v997
      %1088 = vst [vmem:[#allocation2 + $0x48] sm:$0xff] %v998
      %1089 = vrot.lane.b32.xlu0 %v997, 127
      %v1090 = vpop.permute.xlu0 %1089
      %1091 = vrot.lane.b32.xlu0 %v998, 127
      %v1092 = vpop.permute.xlu0 %1091
      %v1093 = vsel %vm580, %v1090, %v1092
      %v1094 = vsel %vm580, %v1092, %v1090
      %v1095 = vld [vmem:[%s617] ss:$8 sm:$0x3]
      %v1097 = vlaneseq
      %v1098 = vshrl.u32 %v1097, 7
      %v1099 = vsub.s32 0, %v1098
      %v1100 = vrot.slane %v1095, %v1099
      %v1101 = vlaneseq
      %v1102 = vshrl.u32 %v1101, 7
      %v1103 = vsub.s32 1, %v1102
      %v1104 = vrot.slane %v1095, %v1103
      %v1107 = vmul.f32 %v1093, %v1100
      %v1108 = vmul.f32 %v1094, %v1104
      %1109 = vst [vmem:[#allocation2 + $0x50] sm:$0xff] %v1107
      %1110 = vst [vmem:[#allocation2 + $0x58] sm:$0xff] %v1108
      %1111 = vrot.lane.b32.xlu0 %v997, 113
      %v1112 = vpop.permute.xlu0 %1111
      %1113 = vrot.lane.b32.xlu0 %v998, 113
      %v1114 = vpop.permute.xlu0 %1113
      %v1115 = vsel %vm657, %v1112, %v1114
      %v1116 = vsel %vm657, %v1114, %v1112
      %v1117 = vld [vmem:[%s694] ss:$8 sm:$0x3]
      %v1119 = vlaneseq
      %v1120 = vshrl.u32 %v1119, 7
      %v1121 = vsub.s32 0, %v1120
      %v1122 = vrot.slane %v1117, %v1121
      %v1123 = vlaneseq
      %v1124 = vshrl.u32 %v1123, 7
      %v1125 = vsub.s32 1, %v1124
      %v1126 = vrot.slane %v1117, %v1125
      %v1129 = vmul.f32 %v1115, %v1122
      %v1130 = vmul.f32 %v1116, %v1126
      %1131 = vst [vmem:[#allocation2 + $0x60] sm:$0xff] %v1129
      %1132 = vst [vmem:[#allocation2 + $0x68] sm:$0xff] %v1130
      %1133 = vrot.lane.b32.xlu0 %v997, 112
      %v1134 = vpop.permute.xlu0 %1133
      %1135 = vrot.lane.b32.xlu0 %v998, 112
      %v1136 = vpop.permute.xlu0 %1135
      %v1137 = vsel %vm734, %v1134, %v1136
      %v1138 = vsel %vm734, %v1136, %v1134
      %v1139 = vld [vmem:[%s771] ss:$8 sm:$0x3]
      %v1141 = vlaneseq
      %v1142 = vshrl.u32 %v1141, 7
      %v1143 = vsub.s32 0, %v1142
      %v1144 = vrot.slane %v1139, %v1143
      %v1145 = vlaneseq
      %v1146 = vshrl.u32 %v1145, 7
      %v1147 = vsub.s32 1, %v1146
      %v1148 = vrot.slane %v1139, %v1147
      %v1151 = vmul.f32 %v1137, %v1144
      %v1152 = vmul.f32 %v1138, %v1148
      %1153 = vst [vmem:[#allocation2 + $0x70] sm:$0xff] %v1151
      %1154 = vst [vmem:[#allocation2 + $0x78] sm:$0xff] %v1152
      %1155 = vrot.lane.b32.xlu0 %v997, 111
      %v1156 = vpop.permute.xlu0 %1155
      %1157 = vrot.lane.b32.xlu0 %v998, 111
      %v1158 = vpop.permute.xlu0 %1157
      %v1159 = vsel %vm811, %v1156, %v1158
      %v1160 = vsel %vm811, %v1158, %v1156
      %v1161 = vld [vmem:[%s848] ss:$8 sm:$0x3]
      %v1163 = vlaneseq
      %v1164 = vshrl.u32 %v1163, 7
      %v1165 = vsub.s32 0, %v1164
      %v1166 = vrot.slane %v1161, %v1165
      %v1167 = vlaneseq
      %v1168 = vshrl.u32 %v1167, 7
      %v1169 = vsub.s32 1, %v1168
      %v1170 = vrot.slane %v1161, %v1169
      %v1173 = vmul.f32 %v1159, %v1166
      %v1174 = vmul.f32 %v1160, %v1170
      %1175 = vst [vmem:[#allocation2 + $0x80] sm:$0xff] %v1173
      %1176 = vst [vmem:[#allocation2 + $0x88] sm:$0xff] %v1174
      %v1177 = vld [vmem:[%s4] sm:$0xff]
      %v1178 = vld [vmem:[#allocation2] sm:$0xff]
      %v1179 = vld [vmem:[#allocation2 + $0x8] sm:$0xff]
      %v1180 = vld [vmem:[#allocation2 + $0x10] sm:$0xff]
      %v1181 = vld [vmem:[#allocation2 + $0x18] sm:$0xff]
      %v1182 = vld [vmem:[#allocation2 + $0x20] sm:$0xff]
      %v1183 = vld [vmem:[#allocation2 + $0x28] sm:$0xff]
      %v1184 = vld [vmem:[#allocation2 + $0x30] sm:$0xff]
      %v1185 = vld [vmem:[#allocation2 + $0x38] sm:$0xff]
      %v1186 = vld [vmem:[#allocation2 + $0x40] sm:$0xff]
      %v1187 = vld [vmem:[#allocation2 + $0x48] sm:$0xff]
      %v1188 = vld [vmem:[#allocation2 + $0x50] sm:$0xff]
      %v1189 = vld [vmem:[#allocation2 + $0x58] sm:$0xff]
      %v1190 = vld [vmem:[#allocation2 + $0x60] sm:$0xff]
      %v1191 = vld [vmem:[#allocation2 + $0x68] sm:$0xff]
      %v1192 = vld [vmem:[#allocation2 + $0x70] sm:$0xff]
      %v1193 = vld [vmem:[#allocation2 + $0x78] sm:$0xff]
      %v1194 = vld [vmem:[#allocation2 + $0x80] sm:$0xff]
      %v1195 = vld [vmem:[#allocation2 + $0x88] sm:$0xff]
      %v1197 = vsel %vm903, %v1177, 0
      %1199 = vmatprep.subr.mxu0 %v1179
      %1200 = vmatpush1.msra.mxu0 %v1178
      %1201 = vmatprep.subr.mxu0 %v1181
      %1202 = vmatpush1.msra.mxu0 %v1180
      %1203 = vmatprep.subr.mxu0 %v1183
      %1204 = vmatpush1.msra.mxu0 %v1182
      %1205 = vmatprep.subr.mxu0 %v1185
      %1206 = vmatpush1.msra.mxu0 %v1184
      %1207 = vmatprep.subr.mxu0 %v1187
      %1208 = vmatpush1.msra.mxu0 %v1186
      %1209 = vmatprep.subr.mxu0 %v1189
      %1210 = vmatpush1.msra.mxu0 %v1188
      %1211 = vmatprep.subr.mxu0 %v1191
      %1212 = vmatpush1.msra.mxu0 %v1190
      %1213 = vmatprep.subr.mxu0 %v1193
      %1214 = vmatpush1.msra.mxu0 %v1192
      %1215 = vmatprep.subr.mxu0 %v1195
      %1216 = vmatpush1.msra.mxu0 %v1194
      %1217 = vmatprep.subr.mxu0 0.0
      %1218 = vmatpush1.msra.mxu0 0.0
      %1219 = vmatprep.subr.mxu0 0.0
      %1220 = vmatpush1.msra.mxu0 0.0
      %1221 = vmatprep.subr.mxu0 0.0
      %1222 = vmatpush1.msra.mxu0 0.0
      %1223 = vmatprep.subr.mxu0 0.0
      %1224 = vmatpush1.msra.mxu0 0.0
      %1225 = vmatprep.subr.mxu0 0.0
      %1226 = vmatpush1.msra.mxu0 0.0
      %1227 = vmatprep.subr.mxu0 0.0
      %1228 = vmatpush1.msra.mxu0 0.0
      %1229 = vmatprep.subr.mxu0 0.0
      %1230 = vmatpush1.msra.mxu0 0.0
      %1231 = vmatprep.subr.mxu0 0.0
      %1232 = vmatpush1.msra.mxu0 0.0
      %1233 = vmatprep.subr.mxu0 0.0
      %1234 = vmatpush1.msra.mxu0 0.0
      %1235 = vmatprep.subr.mxu0 0.0
      %1236 = vmatpush1.msra.mxu0 0.0
      %1237 = vmatprep.subr.mxu0 0.0
      %1238 = vmatpush1.msra.mxu0 0.0
      %1239 = vmatprep.subr.mxu0 0.0
      %1240 = vmatpush1.msra.mxu0 0.0
      %1241 = vmatprep.subr.mxu0 0.0
      %1242 = vmatpush1.msra.mxu0 0.0
      %1243 = vmatprep.subr.mxu0 0.0
      %1244 = vmatpush1.msra.mxu0 0.0
      %1245 = vmatprep.subr.mxu0 0.0
      %1246 = vmatpush1.msra.mxu0 0.0
      %1247 = vmatprep.subr.mxu0 0.0
      %1248 = vmatpush1.msra.mxu0 0.0
      %1249 = vmatprep.subr.mxu0 0.0
      %1250 = vmatpush1.msra.mxu0 0.0
      %1251 = vmatprep.subr.mxu0 0.0
      %1252 = vmatpush1.msra.mxu0 0.0
      %1253 = vmatprep.subr.mxu0 0.0
      %1254 = vmatpush1.msra.mxu0 0.0
      %1255 = vmatprep.subr.mxu0 0.0
      %1256 = vmatpush1.msra.mxu0 0.0
      %1257 = vmatprep.subr.mxu0 0.0
      %1258 = vmatpush1.msra.mxu0 0.0
      %1259 = vmatprep.subr.mxu0 0.0
      %1260 = vmatpush1.msra.mxu0 0.0
      %1261 = vmatprep.subr.mxu0 0.0
      %1262 = vmatpush1.msra.mxu0 0.0
      %1263 = vmatprep.mubr.f32.mxu0 0.0
      %1264 = vmatmul.mubr.f32.gmra.mrb[0].mxu0 %v1197
      %v1265 = vpop.f32.mrb[0].mxu0
      %v1266 = vadd.f32 0.0, %v1265
      %v1267 = vpop.f32.mrb[0].mxu0
      %v1268 = vadd.f32 0.0, %v1267
      %1269 = vdwg.mxu0
      %v1270 = vadd.f32 %v1266, %v1268
      %1271 = vadd.xlane.f32.xlu0 %v1270
      %v1272 = vpop.xlane.xlu0 %1271
      %v1273 = vmul.f32 %v1272, 0.00390625
      %v1274 = vmul.f32 %v1266, %v1266
      %v1275 = vmul.f32 %v1268, %v1268
      %v1276 = vadd.f32 %v1274, %v1275
      %1277 = vadd.xlane.f32.xlu0 %v1276
      %v1278 = vpop.xlane.xlu0 %1277
      %v1279 = vmul.f32 %v1278, 0.00390625
      %v1280 = vmul.f32 %v1273, %v1273
      %v1281 = vsub.f32 %v1279, %v1280
      %v1282 = vmax.f32 %v1281, 0.0
      %v1283 = vsub.f32 %v1266, %v1273
      %v1284 = vsub.f32 %v1268, %v1273
      %v1285 = vadd.f32 %v1282, 1e-05
      %v1286 = vrsqrt.pop %v1285
      %v1287 = vmul.f32 %v1283, %v1286
      %v1288 = vmul.f32 %v1284, %v1286
      %v1289 = vmax.f32 %v1287, 0.0
      %v1290 = vmax.f32 %v1288, 0.0
      %1291 = vst [vmem:[%s244] sm:$0xff] %v1289
      %1292 = vst [vmem:[%s244 + $0x8] sm:$0xff] %v1290
      %p1293 = scmp.lt.s32.totalorder %s16, 1
      %s1294 = scalar_select %p1293, %s16, 1
      %s1295 = smul.addr %s1294, 2
      %s1296 = smul.addr %s1295, 8
      %s1297 = scalar_lea.vmem %s5, %s1296
      // Predicated region
      $region41: #{decoder_forward.1} parent=39 // pred_check
        %p1298 = pneg %p149
      $region42: #{decoder_forward.1} parent=39 // pred_check_branch
        %1300 = sbr.rel (%p1298) target = $region44
      $region43: #{decoder_forward.1} parent=39 // pred_region
        _
      $region44: #{decoder_forward.1} parent=39 // pred_fallthru
        _
    $region40: #{decoder_forward.1} parent=5 // pred_fallthru
      _
    %p1301 = scmp.le.s32.totalorder 2, %s11
    // Predicated region
    $region45: #{decoder_forward.1} parent=5 // pred_check
      %p1302 = pneg %p1301
    $region46: #{decoder_forward.1} parent=5 // pred_check_branch
      %1304 = sbr.rel (%p1302) target = $region48
    $region47: #{decoder_forward.1} parent=5 // pred_region
      %s1305 = ssub.s32 %s11, 2
      // Predicated region
      $region49: #{decoder_forward.1} parent=47 // pred_check
        %p1306 = pneg %p155
      $region50: #{decoder_forward.1} parent=47 // pred_check_branch
        %1308 = sbr.rel (%p1306) target = $region52
      $region51: #{decoder_forward.1} parent=47 // pred_region
        %p1309 = scmp.lt.s32.totalorder %s17, 1
        %s1310 = scalar_select %p1309, %s17, 1
        %s1311 = smul.addr %s1310, 2
        %s1312 = smul.addr %s1311, 8
        %s1313 = scalar_lea.vmem %s5, %s1312
      $region52: #{decoder_forward.1} parent=47 // pred_fallthru
        _
    $region48: #{decoder_forward.1} parent=5 // pred_fallthru
      _
  $region6: #{decoder_forward.1} parent=0 // loop_footer
    %s15 = sadd.s32 1, %s11
  $region7: #{decoder_forward.1} parent=0 // loop_footer_branch
    %10 = sbr.rel target = $region3
  $region8: #{decoder_forward.1} parent=0 // loop_exit
    _

</llo_original>
